<compile_context>
chip_gen: v6e
topology: v6e:2x2x1
jax: 0.10.0
libtpu: 0.0.40
codegen_flags: <defaults>
</compile_context>

<pallas_src>
import functools
import math

import jax
import jax.numpy as jnp
from jax import lax
from jax.experimental import pallas as pl
from jax.experimental.pallas import tpu as pltpu

_COMPUTE_DTYPE = jnp.bfloat16          # MXU input dtype (accumulation is always f32)
_LN_EPS = 1e-5
_VMEM_LIMIT = 32 * 1024 * 1024         # leaves headroom on v7x (64 MiB VMEM per TC)
_LOGITS_DTYPE = jnp.float32            # set to bf16 if the downstream loss allows


def _round_up(x, m):
    return (x + m - 1) // m * m


def _pick_tile(dim, cap, *, lane=False):
    """Largest divisor of `dim` that is <= cap.  Lane (last) dims only accept
    multiples of 128 (or the full dim, which is always legal); sublane dims accept
    8-aligned divisors.  Arrays whose lane dim has no such divisor must be padded
    by the caller (done for the vocab projection at init time)."""
    if dim <= cap:
        return dim
    align = 128 if lane else 8
    t = cap - cap % align
    while t >= align:
        if dim % t == 0:
            return t
        t -= align
    return dim                          # full-dim block is always legal


def _mosaic(dim_sem):
    return pltpu.CompilerParams(dimension_semantics=dim_sem,
                                vmem_limit_bytes=_VMEM_LIMIT)


# --------------------------- tiled/gridded matmul ---------------------------

def _matmul_kernel(x_ref, w_ref, b_ref, o_ref, acc_ref):
    k = pl.program_id(2)

    @pl.when(k == 0)
    def _():
        acc_ref[...] = jnp.zeros_like(acc_ref)

    # bf16 x bf16 -> f32 accumulation on the MXU
    acc_ref[...] += jnp.dot(x_ref[...], w_ref[...], preferred_element_type=jnp.float32)

    @pl.when(k == pl.num_programs(2) - 1)
    def _():
        o_ref[...] = (acc_ref[...] + b_ref[...]).astype(o_ref.dtype)


def linear(x, w, b, out_dtype=None, tm_cap=256, tn_cap=512, tk_cap=512):
    """o = x @ w + b, tiled over (M, N, K) with a resident f32 accumulator.
    Lane-dim tiles (tn, tk) are forced to 128-multiples (or full dim)."""
    m, kdim = x.shape
    n = w.shape[1]
    out_dtype = out_dtype or x.dtype
    tm = _pick_tile(m, tm_cap)
    tn = _pick_tile(n, tn_cap, lane=True)
    tk = _pick_tile(kdim, tk_cap, lane=True)
    grid = (m // tm, n // tn, kdim // tk)
    return pl.pallas_call(
        _matmul_kernel,
        out_shape=jax.ShapeDtypeStruct((m, n), out_dtype),
        grid=grid,
        in_specs=[
            pl.BlockSpec((tm, tk), lambda i, j, k: (i, k)),
            pl.BlockSpec((tk, tn), lambda i, j, k: (k, j)),
            pl.BlockSpec((1, tn), lambda i, j, k: (0, j)),
        ],
        out_specs=pl.BlockSpec((tm, tn), lambda i, j, k: (i, j)),
        scratch_shapes=[pltpu.VMEM((tm, tn), jnp.float32)],
        compiler_params=_mosaic(("parallel", "parallel", "arbitrary")),
    )(x, w, b)


# --------------------------------- attention --------------------------------

def _attention_kernel(qkv_ref, o_ref, *, nhead, head_dim, scale):
    # Block is (Bt, S, 3D) bf16, lane-dense: all heads of Bt batch elements.
    d = nhead * head_dim
    for h in range(nhead):                                   # static head loop
        lo = h * head_dim
        # Fold 1/sqrt(hd) into q (bf16) instead of scaling the (S,S) f32 scores.
        q = qkv_ref[:, :, lo:lo + head_dim] * scale          # (Bt, S, hd) bf16
        k = qkv_ref[:, :, d + lo:d + lo + head_dim]
        v = qkv_ref[:, :, 2 * d + lo:2 * d + lo + head_dim]
        # Batched over the Bt batch elements (leading batch dim -> clean MXU lowering).
        sc = jnp.einsum('bqd,bkd->bqk', q, k,
                        preferred_element_type=jnp.float32)  # (Bt, S, S) f32
        sc = sc - jnp.max(sc, axis=-1, keepdims=True)
        p = jnp.exp(sc)
        p = p * pl.reciprocal(jnp.sum(p, axis=-1, keepdims=True), approx=True)
        o_h = jnp.einsum('bqk,bkd->bqd', p.astype(v.dtype), v,
                         preferred_element_type=jnp.float32)  # (Bt, S, hd) f32
        # Direct per-head store into the merged-head layout (no full-width concat).
        o_ref[:, :, lo:lo + head_dim] = o_h.astype(o_ref.dtype)


def attention(qkv, b, s, nhead, head_dim):
    """qkv: (B*S, 3D) bf16 from the QKV projection.  Several batch elements are
    processed per grid step; head slicing happens inside the kernel on a
    lane-dense (Bt, S, 3D) block (no 5-D lane-sparse BlockSpec view)."""
    d = nhead * head_dim
    qkv3 = qkv.reshape(b, s, 3 * d)                       # free metadata reshape
    bt = 1
    for cand in range(b, 0, -1):                          # largest divisor with <=512 rows
        if b % cand == 0 and cand * s <= 512:
            bt = cand
            break
    out = pl.pallas_call(
        functools.partial(_attention_kernel, nhead=nhead, head_dim=head_dim,
                          scale=1.0 / math.sqrt(head_dim)),
        out_shape=jax.ShapeDtypeStruct((b, s, d), qkv.dtype),
        grid=(b // bt,),
        in_specs=[pl.BlockSpec((bt, s, 3 * d), lambda i: (i, 0, 0))],
        out_specs=pl.BlockSpec((bt, s, d), lambda i: (i, 0, 0)),
        compiler_params=_mosaic(("parallel",)),
    )(qkv3)
    return out.reshape(b * s, d)                          # free metadata reshape


# ------------------ fused out-projection + residual + LayerNorm -------------

def _proj_residual_ln_kernel(a_ref, x_ref, w_ref, b_ref, g_ref, beta_ref, o_ref, *, eps):
    y = jnp.dot(a_ref[...], w_ref[...], preferred_element_type=jnp.float32) + b_ref[...]
    h = x_ref[...].astype(jnp.float32) + y
    mu = jnp.mean(h, axis=-1, keepdims=True)
    c = h - mu
    var = jnp.mean(c * c, axis=-1, keepdims=True)
    o_ref[...] = (c * lax.rsqrt(var + eps) * g_ref[...] + beta_ref[...]).astype(o_ref.dtype)


def proj_residual_ln(attn, x, w, b, g, beta):
    m, d = x.shape
    tm = _pick_tile(m, 128)                               # 128-cap: safe on v7x VMEM
    row = pl.BlockSpec((tm, d), lambda i: (i, 0))
    w_full = pl.BlockSpec((d, d), lambda i: (0, 0))       # constant map -> stays resident
    vec = pl.BlockSpec((1, d), lambda i: (0, 0))
    return pl.pallas_call(
        functools.partial(_proj_residual_ln_kernel, eps=_LN_EPS),
        out_shape=jax.ShapeDtypeStruct((m, d), x.dtype),
        grid=(m // tm,),
        in_specs=[row, row, w_full, vec, vec, vec],
        out_specs=row,
        compiler_params=_mosaic(("parallel",)),
    )(attn, x, w, b, g, beta)


# ---------------- fused FF1 + ReLU + FF2 + residual + LayerNorm -------------

def _ffn_residual_ln_kernel(x_ref, w1_ref, b1_ref, w2_ref, b2_ref, g_ref, beta_ref,
                            o_ref, acc_ref, *, eps, ff_chunk):
    x = x_ref[...]
    ff = w1_ref.shape[1]
    nc = ff // ff_chunk
    # Accumulator starts at residual + b2 so no extra full-width pass is needed.
    acc_ref[...] = x.astype(jnp.float32) + b2_ref[...]
    # Chunk the FF dimension: the (tm, ff_chunk) ReLU intermediate is consumed
    # immediately, so the full (tm, FF) f32 intermediate never materializes.
    for c in range(nc):                                   # static, small chunk loop
        off = c * ff_chunk
        h = jnp.dot(x, w1_ref[:, off:off + ff_chunk],
                    preferred_element_type=jnp.float32) + b1_ref[:, off:off + ff_chunk]
        h = jnp.maximum(h, 0.0).astype(_COMPUTE_DTYPE)    # ReLU in f32, matmul in bf16
        acc_ref[...] += jnp.dot(h, w2_ref[off:off + ff_chunk, :],
                                preferred_element_type=jnp.float32)
    r = acc_ref[...]
    mu = jnp.mean(r, axis=-1, keepdims=True)
    c0 = r - mu
    var = jnp.mean(c0 * c0, axis=-1, keepdims=True)
    o_ref[...] = (c0 * lax.rsqrt(var + eps) * g_ref[...] + beta_ref[...]).astype(o_ref.dtype)


def ffn_residual_ln(x, w1, b1, w2, b2, g, beta):
    m, d = x.shape
    ff = w1.shape[1]
    tm = _pick_tile(m, 128)                               # 128-cap: safe on v7x VMEM
    ff_chunk = _pick_tile(ff, 512, lane=True)             # <=512-wide FF chunks
    row = pl.BlockSpec((tm, d), lambda i: (i, 0))
    return pl.pallas_call(
        functools.partial(_ffn_residual_ln_kernel, eps=_LN_EPS, ff_chunk=ff_chunk),
        out_shape=jax.ShapeDtypeStruct((m, d), x.dtype),
        grid=(m // tm,),
        in_specs=[row,
                  pl.BlockSpec((d, ff), lambda i: (0, 0)),
                  pl.BlockSpec((1, ff), lambda i: (0, 0)),
                  pl.BlockSpec((ff, d), lambda i: (0, 0)),
                  pl.BlockSpec((1, d), lambda i: (0, 0)),
                  pl.BlockSpec((1, d), lambda i: (0, 0)),
                  pl.BlockSpec((1, d), lambda i: (0, 0))],
        out_specs=row,
        scratch_shapes=[pltpu.VMEM((tm, d), jnp.float32)],
        compiler_params=_mosaic(("parallel",)),
    )(x, w1, b1, w2, b2, g, beta)


# -------------------- fused GaussianLayer + combine_outputs -----------------

def _gaussian_combine_kernel(t_ref, wmv_ref, bmv_ref, eps_ref, comb_ref, unc_ref,
                             *, d_model):
    t = t_ref[...]
    # One MXU pass produces both mean and log_var ([Wm | Wv] fused at init time).
    mv = jnp.dot(t, wmv_ref[...], preferred_element_type=jnp.float32) + bmv_ref[...]
    mean = mv[:, :d_model]
    log_var = mv[:, d_model:]
    std = jnp.exp(0.5 * log_var)
    sample = mean + eps_ref[...].astype(jnp.float32) * std
    unc = jnp.mean(log_var, axis=-1, keepdims=True)       # per-token uncertainty
    conf = 1.0 - unc                                      # (tm, 1) f32, computed once
    tf = t.astype(jnp.float32)
    # TODO(synk): the PyTorch combine_outputs broadcasts a (B,S) confidence against a
    # (B,S,D) tensor, which raises for generic shapes; we apply the evident per-token
    # intent (confidence broadcast over the feature dim).
    # Blend rewritten as tf + conf*(sample - tf): one fewer full-width multiply.
    comb_ref[...] = (tf + conf * (sample - tf)).astype(comb_ref.dtype)
    unc_ref[...] = unc.astype(unc_ref.dtype)              # tiny (tm,1) stream


def gaussian_combine(t, wmv, bmv, eps):
    m, d = t.shape
    tm = _pick_tile(m, 128)
    eps = eps.astype(_COMPUTE_DTYPE)                      # halve the eps HBM->VMEM DMA
    row = pl.BlockSpec((tm, d), lambda i: (i, 0))
    return pl.pallas_call(
        functools.partial(_gaussian_combine_kernel, d_model=d),
        out_shape=(jax.ShapeDtypeStruct((m, d), t.dtype),
                   jax.ShapeDtypeStruct((m, 1), jnp.float32)),
        grid=(m // tm,),
        in_specs=[row,
                  pl.BlockSpec((d, 2 * d), lambda i: (0, 0)),
                  pl.BlockSpec((1, 2 * d), lambda i: (0, 0)),
                  row],
        out_specs=(row, pl.BlockSpec((tm, 1), lambda i: (i, 0))),
        compiler_params=_mosaic(("parallel",)),
    )(t, wmv, bmv, eps)


# ------------------------------- model wrapper ------------------------------

def encoder_layer(x, lp, b, s, nhead):
    d = x.shape[1]
    hd = d // nhead
    # nn.TransformerEncoderLayer defaults: post-norm, relu, dropout off in eval.
    # TODO(synk): dropout and training-mode embedding noise are omitted (eval mode).
    qkv = linear(x, lp["w_in"], lp["b_in"])                         # (M, 3D) bf16
    attn = attention(qkv, b, s, nhead, hd)                          # (M, D) bf16
    x = proj_residual_ln(attn, x, lp["w_out"], lp["b_out"], lp["ln1_g"], lp["ln1_b"])
    return ffn_residual_ln(x, lp["w_ff1"], lp["b_ff1"], lp["w_ff2"], lp["b_ff2"],
                           lp["ln2_g"], lp["ln2_b"])


def gaussian_transformer_llm(src, eps_noise, params, *, nhead, vocab_size):
    b, s = src.shape
    # ProbabilisticEmbedding (eval mode: no additive noise); gather kept as JAX glue.
    x = jnp.take(params["embedding"], src.reshape(-1), axis=0)      # (M, D) bf16
    for lp in params["layers"]:
        x = encoder_layer(x, lp, b, s, nhead)
    combined, unc = gaussian_combine(x, params["wmv"], params["bmv"], eps_noise)
    # Vocab projection runs on 128-padded columns (lane-dense, unmasked stores);
    # padding columns are sliced off afterwards.
    logits = linear(combined, params["w_vocab"], params["b_vocab"],
                    out_dtype=_LOGITS_DTYPE, tn_cap=1024)
    logits = logits[:, :vocab_size]
    return logits.reshape(b, s, vocab_size), unc.reshape(b, s)


def init_params(key, vocab, d, nhead, layers, ff):
    def normal(k, shape, scale):
        return (jax.random.normal(k, shape, jnp.float32) * scale).astype(_COMPUTE_DTYPE)

    vocab_pad = _round_up(vocab, 128)     # lane-pad the vocab projection to 128-multiple
    keys = iter(jax.random.split(key, 8 + 4 * layers))
    p = {
        "embedding": normal(next(keys), (vocab, d), 0.1),
        "layers": [],
        # GaussianLayer weights fused: [Wm | Wv] -> one (D, 2D) MXU pass.
        "wmv": jnp.concatenate([normal(next(keys), (d, d), 0.05),
                                normal(next(keys), (d, d), 0.05)], axis=1),
        "bmv": jnp.zeros((1, 2 * d), jnp.float32),
        "w_vocab": jnp.pad(normal(next(keys), (d, vocab), 0.05),
                           ((0, 0), (0, vocab_pad - vocab))),
        "b_vocab": jnp.zeros((1, vocab_pad), jnp.float32),
    }
    for _ in range(layers):
        p["layers"].append({
            "w_in":  normal(next(keys), (d, 3 * d), 0.05),
            "b_in":  jnp.zeros((1, 3 * d), jnp.float32),
            "w_out": normal(next(keys), (d, d), 0.05),
            "b_out": jnp.zeros((1, d), jnp.float32),
            "ln1_g": jnp.ones((1, d), jnp.float32),
            "ln1_b": jnp.zeros((1, d), jnp.float32),
            "w_ff1": normal(next(keys), (d, ff), 0.05),
            "b_ff1": jnp.zeros((1, ff), jnp.float32),
            "w_ff2": normal(next(keys), (ff, d), 0.05),
            "b_ff2": jnp.zeros((1, d), jnp.float32),
            "ln2_g": jnp.ones((1, d), jnp.float32),
            "ln2_b": jnp.zeros((1, d), jnp.float32),
        })
    return p


if __name__ == "__main__":
    # Small shapes consistent with the module's forward (scaled down from
    # vocab=10000, d_model=512, nhead=8, layers=6, ff=2048, src=(32,50)).
    VOCAB, D, NHEAD, LAYERS, FF = 128, 32, 4, 2, 64
    B, S = 2, 8

    root = jax.random.PRNGKey(0)
    k_param, k_src, k_eps = jax.random.split(root, 3)
    params = init_params(k_param, VOCAB, D, NHEAD, LAYERS, FF)
    src = jax.random.randint(k_src, (B, S), 0, VOCAB, dtype=jnp.int32)
    # GaussianLayer eps (torch.randn_like) passed explicitly; bf16 halves its DMA.
    eps_noise = jax.random.normal(k_eps, (B * S, D), jnp.float32).astype(_COMPUTE_DTYPE)

    fwd = jax.jit(functools.partial(gaussian_transformer_llm, nhead=NHEAD,
                                    vocab_size=VOCAB))
    logits, uncertainty = fwd(src, eps_noise, params)
    jax.block_until_ready((logits, uncertainty))

    assert logits.shape == (B, S, VOCAB)
    assert uncertainty.shape == (B, S)
    assert bool(jnp.all(jnp.isfinite(logits))) and bool(jnp.all(jnp.isfinite(uncertainty)))
    print("KERNEL_OK")
</pallas_src>

<mosaic_0001>
module attributes {stable_mosaic.version = 11 : i64} {
  func.func @_proj_residual_ln_kernel(%arg0: i32, %arg1: memref<16x32xbf16, #tpu.memory_space<vmem>>, %arg2: memref<16x32xbf16, #tpu.memory_space<vmem>>, %arg3: memref<32x32xbf16, #tpu.memory_space<vmem>>, %arg4: memref<1x32xf32, #tpu.memory_space<vmem>>, %arg5: memref<1x32xf32, #tpu.memory_space<vmem>>, %arg6: memref<1x32xf32, #tpu.memory_space<vmem>>, %arg7: memref<16x32xbf16, #tpu.memory_space<vmem>>) attributes {dimension_semantics = [#tpu.dimension_semantics<parallel>], iteration_bounds = array<i64: 1>, scalar_prefetch = 0 : i64, scratch_operands = 0 : i64, tpu.core_type = #tpu.core_type<tc>, window_params = [{transform_indices = @transform_0, window_bounds = array<i64: 16, 32>}, {transform_indices = @transform_1, window_bounds = array<i64: 16, 32>}, {pipeline_mode = #tpu.pipeline_mode<synchronous>, transform_indices = @transform_2, window_bounds = array<i64: 32, 32>}, {pipeline_mode = #tpu.pipeline_mode<synchronous>, transform_indices = @transform_3, window_bounds = array<i64: 1, 32>}, {pipeline_mode = #tpu.pipeline_mode<synchronous>, transform_indices = @transform_4, window_bounds = array<i64: 1, 32>}, {pipeline_mode = #tpu.pipeline_mode<synchronous>, transform_indices = @transform_5, window_bounds = array<i64: 1, 32>}, {transform_indices = @transform_6, window_bounds = array<i64: 16, 32>}]} {
    %c0 = arith.constant 0 : index
    %c0_0 = arith.constant 0 : index
    %0 = vector.load %arg1[%c0, %c0_0] : memref<16x32xbf16, #tpu.memory_space<vmem>>, vector<16x32xbf16>
    %c0_1 = arith.constant 0 : index
    %c0_2 = arith.constant 0 : index
    %1 = vector.load %arg3[%c0_1, %c0_2] : memref<32x32xbf16, #tpu.memory_space<vmem>>, vector<32x32xbf16>
    %cst = arith.constant dense<0.000000e+00> : vector<16x32xf32>
    %2 = tpu.matmul %0, %1, %cst {dimension_numbers = #tpu.dot_dimension_numbers<[1], [0], [0], [1], [0, 0, 1, 1], [], []>} : vector<16x32xbf16>, vector<32x32xbf16>, vector<16x32xf32> -> vector<16x32xf32>
    %c0_3 = arith.constant 0 : index
    %c0_4 = arith.constant 0 : index
    %3 = vector.load %arg4[%c0_3, %c0_4] : memref<1x32xf32, #tpu.memory_space<vmem>>, vector<1x32xf32>
    %4 = vector.broadcast %3 : vector<1x32xf32> to vector<16x32xf32>
    %5 = arith.addf %2, %4 : vector<16x32xf32>
    %c0_5 = arith.constant 0 : index
    %c0_6 = arith.constant 0 : index
    %6 = vector.load %arg2[%c0_5, %c0_6] : memref<16x32xbf16, #tpu.memory_space<vmem>>, vector<16x32xbf16>
    %7 = arith.extf %6 : vector<16x32xbf16> to vector<16x32xf32>
    %8 = arith.addf %7, %5 : vector<16x32xf32>
    %cst_7 = arith.constant dense<0.000000e+00> : vector<16xf32>
    %9 = vector.multi_reduction <add>, %8, %cst_7 [1] : vector<16x32xf32> to vector<16xf32>
    %10 = vector.shape_cast %9 : vector<16xf32> to vector<16x1xf32>
    %cst_8 = arith.constant 3.200000e+01 : f32
    %11 = vector.broadcast %cst_8 : f32 to vector<16x1xf32>
    %12 = arith.divf %10, %11 : vector<16x1xf32>
    %13 = vector.broadcast %12 : vector<16x1xf32> to vector<16x32xf32>
    %14 = arith.subf %8, %13 : vector<16x32xf32>
    %15 = arith.mulf %14, %14 : vector<16x32xf32>
    %cst_9 = arith.constant dense<0.000000e+00> : vector<16xf32>
    %16 = vector.multi_reduction <add>, %15, %cst_9 [1] : vector<16x32xf32> to vector<16xf32>
    %17 = vector.shape_cast %16 : vector<16xf32> to vector<16x1xf32>
    %cst_10 = arith.constant 3.200000e+01 : f32
    %18 = vector.broadcast %cst_10 : f32 to vector<16x1xf32>
    %19 = arith.divf %17, %18 : vector<16x1xf32>
    %cst_11 = arith.constant 9.99999974E-6 : f32
    %20 = vector.broadcast %cst_11 : f32 to vector<16x1xf32>
    %21 = arith.addf %19, %20 : vector<16x1xf32>
    %22 = math.rsqrt %21 : vector<16x1xf32>
    %23 = vector.broadcast %22 : vector<16x1xf32> to vector<16x32xf32>
    %24 = arith.mulf %14, %23 : vector<16x32xf32>
    %c0_12 = arith.constant 0 : index
    %c0_13 = arith.constant 0 : index
    %25 = vector.load %arg5[%c0_12, %c0_13] : memref<1x32xf32, #tpu.memory_space<vmem>>, vector<1x32xf32>
    %26 = vector.broadcast %25 : vector<1x32xf32> to vector<16x32xf32>
    %27 = arith.mulf %24, %26 : vector<16x32xf32>
    %c0_14 = arith.constant 0 : index
    %c0_15 = arith.constant 0 : index
    %28 = vector.load %arg6[%c0_14, %c0_15] : memref<1x32xf32, #tpu.memory_space<vmem>>, vector<1x32xf32>
    %29 = vector.broadcast %28 : vector<1x32xf32> to vector<16x32xf32>
    %30 = arith.addf %27, %29 : vector<16x32xf32>
    %31 = arith.truncf %30 : vector<16x32xf32> to vector<16x32xbf16>
    %c0_16 = arith.constant 0 : index
    %c0_17 = arith.constant 0 : index
    %32 = vector.load %arg7[%c0_16, %c0_17] : memref<16x32xbf16, #tpu.memory_space<vmem>>, vector<16x32xbf16>
    tpu.vector_store %arg7[%c0_16, %c0_17], %31 {strides = array<i32>} : memref<16x32xbf16, #tpu.memory_space<vmem>>, vector<16x32xbf16>,
    return
  }
  func.func @transform_0(%arg0: i32) -> (i32, i32) {
    %c0_i32 = arith.constant 0 : i32
    %c0_i32_0 = arith.constant 0 : i32
    return %arg0, %c0_i32 : i32, i32
  }
  func.func @transform_1(%arg0: i32) -> (i32, i32) {
    %c0_i32 = arith.constant 0 : i32
    %c0_i32_0 = arith.constant 0 : i32
    return %arg0, %c0_i32 : i32, i32
  }
  func.func @transform_2(%arg0: i32) -> (i32, i32) {
    %c0_i32 = arith.constant 0 : i32
    %c0_i32_0 = arith.constant 0 : i32
    %c0_i32_1 = arith.constant 0 : i32
    return %c0_i32, %c0_i32_0 : i32, i32
  }
  func.func @transform_3(%arg0: i32) -> (i32, i32) {
    %c0_i32 = arith.constant 0 : i32
    %c0_i32_0 = arith.constant 0 : i32
    %c0_i32_1 = arith.constant 0 : i32
    return %c0_i32, %c0_i32_0 : i32, i32
  }
  func.func @transform_4(%arg0: i32) -> (i32, i32) {
    %c0_i32 = arith.constant 0 : i32
    %c0_i32_0 = arith.constant 0 : i32
    %c0_i32_1 = arith.constant 0 : i32
    return %c0_i32, %c0_i32_0 : i32, i32
  }
  func.func @transform_5(%arg0: i32) -> (i32, i32) {
    %c0_i32 = arith.constant 0 : i32
    %c0_i32_0 = arith.constant 0 : i32
    %c0_i32_1 = arith.constant 0 : i32
    return %c0_i32, %c0_i32_0 : i32, i32
  }
  func.func @transform_6(%arg0: i32) -> (i32, i32) {
    %c0_i32 = arith.constant 0 : i32
    %c0_i32_0 = arith.constant 0 : i32
    return %arg0, %c0_i32 : i32, i32
  }
}

module attributes {stable_mosaic.version = 11 : i64} {
  func.func @_matmul_kernel(%arg0: i32, %arg1: i32, %arg2: i32, %arg3: memref<16x32xbf16, #tpu.memory_space<vmem>>, %arg4: memref<32x96xbf16, #tpu.memory_space<vmem>>, %arg5: memref<1x96xf32, #tpu.memory_space<vmem>>, %arg6: memref<16x96xbf16, #tpu.memory_space<vmem>>, %arg7: memref<16x96xf32, #tpu.memory_space<vmem>>) attributes {dimension_semantics = [#tpu.dimension_semantics<parallel>, #tpu.dimension_semantics<parallel>, #tpu.dimension_semantics<arbitrary>], iteration_bounds = array<i64: 1, 1, 1>, scalar_prefetch = 0 : i64, scratch_operands = 1 : i64, tpu.core_type = #tpu.core_type<tc>, window_params = [{transform_indices = @transform_0, window_bounds = array<i64: 16, 32>}, {transform_indices = @transform_1, window_bounds = array<i64: 32, 96>}, {transform_indices = @transform_2, window_bounds = array<i64: 1, 96>}, {transform_indices = @transform_3, window_bounds = array<i64: 16, 96>}]} {
    %c0_i32 = arith.constant 0 : i32
    %0 = arith.cmpi eq, %arg2, %c0_i32 : i32
    %1 = arith.extui %0 : i1 to i32
    %c0_i32_0 = arith.constant 0 : i32
    %2 = arith.cmpi ne, %1, %c0_i32_0 : i32
    scf.if %2 {
      %cst_10 = arith.constant 0.000000e+00 : f32
      %12 = vector.broadcast %cst_10 : f32 to vector<16x96xf32>
      %c0_11 = arith.constant 0 : index
      %c0_12 = arith.constant 0 : index
      %13 = vector.load %arg7[%c0_11, %c0_12] : memref<16x96xf32, #tpu.memory_space<vmem>>, vector<16x96xf32>
      tpu.vector_store %arg7[%c0_11, %c0_12], %12 {strides = array<i32>} : memref<16x96xf32, #tpu.memory_space<vmem>>, vector<16x96xf32>,
    } else {
    }
    %c0 = arith.constant 0 : index
    %c0_1 = arith.constant 0 : index
    %3 = vector.load %arg7[%c0, %c0_1] : memref<16x96xf32, #tpu.memory_space<vmem>>, vector<16x96xf32>
    %c0_2 = arith.constant 0 : index
    %c0_3 = arith.constant 0 : index
    %4 = vector.load %arg3[%c0_2, %c0_3] : memref<16x32xbf16, #tpu.memory_space<vmem>>, vector<16x32xbf16>
    %c0_4 = arith.constant 0 : index
    %c0_5 = arith.constant 0 : index
    %5 = vector.load %arg4[%c0_4, %c0_5] : memref<32x96xbf16, #tpu.memory_space<vmem>>, vector<32x96xbf16>
    %cst = arith.constant dense<0.000000e+00> : vector<16x96xf32>
    %6 = tpu.matmul %4, %5, %cst {dimension_numbers = #tpu.dot_dimension_numbers<[1], [0], [0], [1], [0, 0, 1, 1], [], []>} : vector<16x32xbf16>, vector<32x96xbf16>, vector<16x96xf32> -> vector<16x96xf32>
    %7 = arith.addf %3, %6 : vector<16x96xf32>
    %c0_6 = arith.constant 0 : index
    %c0_7 = arith.constant 0 : index
    %8 = vector.load %arg7[%c0_6, %c0_7] : memref<16x96xf32, #tpu.memory_space<vmem>>, vector<16x96xf32>
    tpu.vector_store %arg7[%c0_6, %c0_7], %7 {strides = array<i32>} : memref<16x96xf32, #tpu.memory_space<vmem>>, vector<16x96xf32>,
    %c0_i32_8 = arith.constant 0 : i32
    %9 = arith.cmpi eq, %arg2, %c0_i32_8 : i32
    %10 = arith.extui %9 : i1 to i32
    %c0_i32_9 = arith.constant 0 : i32
    %11 = arith.cmpi ne, %10, %c0_i32_9 : i32
    scf.if %11 {
      %c0_10 = arith.constant 0 : index
      %c0_11 = arith.constant 0 : index
      %12 = vector.load %arg7[%c0_10, %c0_11] : memref<16x96xf32, #tpu.memory_space<vmem>>, vector<16x96xf32>
      %c0_12 = arith.constant 0 : index
      %c0_13 = arith.constant 0 : index
      %13 = vector.load %arg5[%c0_12, %c0_13] : memref<1x96xf32, #tpu.memory_space<vmem>>, vector<1x96xf32>
      %14 = vector.broadcast %13 : vector<1x96xf32> to vector<16x96xf32>
      %15 = arith.addf %12, %14 : vector<16x96xf32>
      %16 = arith.truncf %15 : vector<16x96xf32> to vector<16x96xbf16>
      %c0_14 = arith.constant 0 : index
      %c0_15 = arith.constant 0 : index
      %17 = vector.load %arg6[%c0_14, %c0_15] : memref<16x96xbf16, #tpu.memory_space<vmem>>, vector<16x96xbf16>
      tpu.vector_store %arg6[%c0_14, %c0_15], %16 {strides = array<i32>} : memref<16x96xbf16, #tpu.memory_space<vmem>>, vector<16x96xbf16>,
    } else {
    }
    return
  }
  func.func @transform_0(%arg0: i32, %arg1: i32, %arg2: i32) -> (i32, i32) {
    %c0_i32 = arith.constant 0 : i32
    return %arg0, %arg2 : i32, i32
  }
  func.func @transform_1(%arg0: i32, %arg1: i32, %arg2: i32) -> (i32, i32) {
    %c0_i32 = arith.constant 0 : i32
    return %arg2, %arg1 : i32, i32
  }
  func.func @transform_2(%arg0: i32, %arg1: i32, %arg2: i32) -> (i32, i32) {
    %c0_i32 = arith.constant 0 : i32
    %c0_i32_0 = arith.constant 0 : i32
    return %c0_i32, %arg1 : i32, i32
  }
  func.func @transform_3(%arg0: i32, %arg1: i32, %arg2: i32) -> (i32, i32) {
    %c0_i32 = arith.constant 0 : i32
    return %arg0, %arg1 : i32, i32
  }
}

module attributes {stable_mosaic.version = 11 : i64} {
  func.func @_ffn_residual_ln_kernel(%arg0: i32, %arg1: memref<16x32xbf16, #tpu.memory_space<vmem>>, %arg2: memref<32x64xbf16, #tpu.memory_space<vmem>>, %arg3: memref<1x64xf32, #tpu.memory_space<vmem>>, %arg4: memref<64x32xbf16, #tpu.memory_space<vmem>>, %arg5: memref<1x32xf32, #tpu.memory_space<vmem>>, %arg6: memref<1x32xf32, #tpu.memory_space<vmem>>, %arg7: memref<1x32xf32, #tpu.memory_space<vmem>>, %arg8: memref<16x32xbf16, #tpu.memory_space<vmem>>, %arg9: memref<16x32xf32, #tpu.memory_space<vmem>>) attributes {dimension_semantics = [#tpu.dimension_semantics<parallel>], iteration_bounds = array<i64: 1>, scalar_prefetch = 0 : i64, scratch_operands = 1 : i64, tpu.core_type = #tpu.core_type<tc>, window_params = [{transform_indices = @transform_0, window_bounds = array<i64: 16, 32>}, {pipeline_mode = #tpu.pipeline_mode<synchronous>, transform_indices = @transform_1, window_bounds = array<i64: 32, 64>}, {pipeline_mode = #tpu.pipeline_mode<synchronous>, transform_indices = @transform_2, window_bounds = array<i64: 1, 64>}, {pipeline_mode = #tpu.pipeline_mode<synchronous>, transform_indices = @transform_3, window_bounds = array<i64: 64, 32>}, {pipeline_mode = #tpu.pipeline_mode<synchronous>, transform_indices = @transform_4, window_bounds = array<i64: 1, 32>}, {pipeline_mode = #tpu.pipeline_mode<synchronous>, transform_indices = @transform_5, window_bounds = array<i64: 1, 32>}, {pipeline_mode = #tpu.pipeline_mode<synchronous>, transform_indices = @transform_6, window_bounds = array<i64: 1, 32>}, {transform_indices = @transform_7, window_bounds = array<i64: 16, 32>}]} {
    %c0 = arith.constant 0 : index
    %c0_0 = arith.constant 0 : index
    %0 = vector.load %arg1[%c0, %c0_0] : memref<16x32xbf16, #tpu.memory_space<vmem>>, vector<16x32xbf16>
    %1 = arith.extf %0 : vector<16x32xbf16> to vector<16x32xf32>
    %c0_1 = arith.constant 0 : index
    %c0_2 = arith.constant 0 : index
    %2 = vector.load %arg5[%c0_1, %c0_2] : memref<1x32xf32, #tpu.memory_space<vmem>>, vector<1x32xf32>
    %3 = vector.broadcast %2 : vector<1x32xf32> to vector<16x32xf32>
    %4 = arith.addf %1, %3 : vector<16x32xf32>
    %c0_3 = arith.constant 0 : index
    %c0_4 = arith.constant 0 : index
    %5 = vector.load %arg9[%c0_3, %c0_4] : memref<16x32xf32, #tpu.memory_space<vmem>>, vector<16x32xf32>
    tpu.vector_store %arg9[%c0_3, %c0_4], %4 {strides = array<i32>} : memref<16x32xf32, #tpu.memory_space<vmem>>, vector<16x32xf32>,
    %c0_5 = arith.constant 0 : index
    %c0_6 = arith.constant 0 : index
    %6 = vector.load %arg2[%c0_5, %c0_6] : memref<32x64xbf16, #tpu.memory_space<vmem>>, vector<32x64xbf16>
    %cst = arith.constant dense<0.000000e+00> : vector<16x64xf32>
    %7 = tpu.matmul %0, %6, %cst {dimension_numbers = #tpu.dot_dimension_numbers<[1], [0], [0], [1], [0, 0, 1, 1], [], []>} : vector<16x32xbf16>, vector<32x64xbf16>, vector<16x64xf32> -> vector<16x64xf32>
    %c0_7 = arith.constant 0 : index
    %c0_8 = arith.constant 0 : index
    %8 = vector.load %arg3[%c0_7, %c0_8] : memref<1x64xf32, #tpu.memory_space<vmem>>, vector<1x64xf32>
    %9 = vector.broadcast %8 : vector<1x64xf32> to vector<16x64xf32>
    %10 = arith.addf %7, %9 : vector<16x64xf32>
    %cst_9 = arith.constant 0.000000e+00 : f32
    %11 = vector.broadcast %cst_9 : f32 to vector<16x64xf32>
    %12 = arith.maximumf %10, %11 : vector<16x64xf32>
    %13 = arith.truncf %12 : vector<16x64xf32> to vector<16x64xbf16>
    %c0_10 = arith.constant 0 : index
    %c0_11 = arith.constant 0 : index
    %14 = vector.load %arg9[%c0_10, %c0_11] : memref<16x32xf32, #tpu.memory_space<vmem>>, vector<16x32xf32>
    %c0_12 = arith.constant 0 : index
    %c0_13 = arith.constant 0 : index
    %15 = vector.load %arg4[%c0_12, %c0_13] : memref<64x32xbf16, #tpu.memory_space<vmem>>, vector<64x32xbf16>
    %cst_14 = arith.constant dense<0.000000e+00> : vector<16x32xf32>
    %16 = tpu.matmul %13, %15, %cst_14 {dimension_numbers = #tpu.dot_dimension_numbers<[1], [0], [0], [1], [0, 0, 1, 1], [], []>} : vector<16x64xbf16>, vector<64x32xbf16>, vector<16x32xf32> -> vector<16x32xf32>
    %17 = arith.addf %14, %16 : vector<16x32xf32>
    %c0_15 = arith.constant 0 : index
    %c0_16 = arith.constant 0 : index
    %18 = vector.load %arg9[%c0_15, %c0_16] : memref<16x32xf32, #tpu.memory_space<vmem>>, vector<16x32xf32>
    tpu.vector_store %arg9[%c0_15, %c0_16], %17 {strides = array<i32>} : memref<16x32xf32, #tpu.memory_space<vmem>>, vector<16x32xf32>,
    %c0_17 = arith.constant 0 : index
    %c0_18 = arith.constant 0 : index
    %19 = vector.load %arg9[%c0_17, %c0_18] : memref<16x32xf32, #tpu.memory_space<vmem>>, vector<16x32xf32>
    %cst_19 = arith.constant dense<0.000000e+00> : vector<16xf32>
    %20 = vector.multi_reduction <add>, %19, %cst_19 [1] : vector<16x32xf32> to vector<16xf32>
    %21 = vector.shape_cast %20 : vector<16xf32> to vector<16x1xf32>
    %cst_20 = arith.constant 3.200000e+01 : f32
    %22 = vector.broadcast %cst_20 : f32 to vector<16x1xf32>
    %23 = arith.divf %21, %22 : vector<16x1xf32>
    %24 = vector.broadcast %23 : vector<16x1xf32> to vector<16x32xf32>
    %25 = arith.subf %19, %24 : vector<16x32xf32>
    %26 = arith.mulf %25, %25 : vector<16x32xf32>
    %cst_21 = arith.constant dense<0.000000e+00> : vector<16xf32>
    %27 = vector.multi_reduction <add>, %26, %cst_21 [1] : vector<16x32xf32> to vector<16xf32>
    %28 = vector.shape_cast %27 : vector<16xf32> to vector<16x1xf32>
    %cst_22 = arith.constant 3.200000e+01 : f32
    %29 = vector.broadcast %cst_22 : f32 to vector<16x1xf32>
    %30 = arith.divf %28, %29 : vector<16x1xf32>
    %cst_23 = arith.constant 9.99999974E-6 : f32
    %31 = vector.broadcast %cst_23 : f32 to vector<16x1xf32>
    %32 = arith.addf %30, %31 : vector<16x1xf32>
    %33 = math.rsqrt %32 : vector<16x1xf32>
    %34 = vector.broadcast %33 : vector<16x1xf32> to vector<16x32xf32>
    %35 = arith.mulf %25, %34 : vector<16x32xf32>
    %c0_24 = arith.constant 0 : index
    %c0_25 = arith.constant 0 : index
    %36 = vector.load %arg6[%c0_24, %c0_25] : memref<1x32xf32, #tpu.memory_space<vmem>>, vector<1x32xf32>
    %37 = vector.broadcast %36 : vector<1x32xf32> to vector<16x32xf32>
    %38 = arith.mulf %35, %37 : vector<16x32xf32>
    %c0_26 = arith.constant 0 : index
    %c0_27 = arith.constant 0 : index
    %39 = vector.load %arg7[%c0_26, %c0_27] : memref<1x32xf32, #tpu.memory_space<vmem>>, vector<1x32xf32>
    %40 = vector.broadcast %39 : vector<1x32xf32> to vector<16x32xf32>
    %41 = arith.addf %38, %40 : vector<16x32xf32>
    %42 = arith.truncf %41 : vector<16x32xf32> to vector<16x32xbf16>
    %c0_28 = arith.constant 0 : index
    %c0_29 = arith.constant 0 : index
    %43 = vector.load %arg8[%c0_28, %c0_29] : memref<16x32xbf16, #tpu.memory_space<vmem>>, vector<16x32xbf16>
    tpu.vector_store %arg8[%c0_28, %c0_29], %42 {strides = array<i32>} : memref<16x32xbf16, #tpu.memory_space<vmem>>, vector<16x32xbf16>,
    return
  }
  func.func @transform_0(%arg0: i32) -> (i32, i32) {
    %c0_i32 = arith.constant 0 : i32
    %c0_i32_0 = arith.constant 0 : i32
    return %arg0, %c0_i32 : i32, i32
  }
  func.func @transform_1(%arg0: i32) -> (i32, i32) {
    %c0_i32 = arith.constant 0 : i32
    %c0_i32_0 = arith.constant 0 : i32
    %c0_i32_1 = arith.constant 0 : i32
    return %c0_i32, %c0_i32_0 : i32, i32
  }
  func.func @transform_2(%arg0: i32) -> (i32, i32) {
    %c0_i32 = arith.constant 0 : i32
    %c0_i32_0 = arith.constant 0 : i32
    %c0_i32_1 = arith.constant 0 : i32
    return %c0_i32, %c0_i32_0 : i32, i32
  }
  func.func @transform_3(%arg0: i32) -> (i32, i32) {
    %c0_i32 = arith.constant 0 : i32
    %c0_i32_0 = arith.constant 0 : i32
    %c0_i32_1 = arith.constant 0 : i32
    return %c0_i32, %c0_i32_0 : i32, i32
  }
  func.func @transform_4(%arg0: i32) -> (i32, i32) {
    %c0_i32 = arith.constant 0 : i32
    %c0_i32_0 = arith.constant 0 : i32
    %c0_i32_1 = arith.constant 0 : i32
    return %c0_i32, %c0_i32_0 : i32, i32
  }
  func.func @transform_5(%arg0: i32) -> (i32, i32) {
    %c0_i32 = arith.constant 0 : i32
    %c0_i32_0 = arith.constant 0 : i32
    %c0_i32_1 = arith.constant 0 : i32
    return %c0_i32, %c0_i32_0 : i32, i32
  }
  func.func @transform_6(%arg0: i32) -> (i32, i32) {
    %c0_i32 = arith.constant 0 : i32
    %c0_i32_0 = arith.constant 0 : i32
    %c0_i32_1 = arith.constant 0 : i32
    return %c0_i32, %c0_i32_0 : i32, i32
  }
  func.func @transform_7(%arg0: i32) -> (i32, i32) {
    %c0_i32 = arith.constant 0 : i32
    %c0_i32_0 = arith.constant 0 : i32
    return %arg0, %c0_i32 : i32, i32
  }
}

module attributes {stable_mosaic.version = 11 : i64} {
  func.func @_attention_kernel(%arg0: i32, %arg1: memref<2x8x96xbf16, #tpu.memory_space<vmem>>, %arg2: memref<2x8x32xbf16, #tpu.memory_space<vmem>>) attributes {dimension_semantics = [#tpu.dimension_semantics<parallel>], iteration_bounds = array<i64: 1>, scalar_prefetch = 0 : i64, scratch_operands = 0 : i64, tpu.core_type = #tpu.core_type<tc>, window_params = [{transform_indices = @transform_0, window_bounds = array<i64: 2, 8, 96>}, {transform_indices = @transform_1, window_bounds = array<i64: 2, 8, 32>}]} {
    %c0 = arith.constant 0 : index
    %c0_0 = arith.constant 0 : index
    %c0_1 = arith.constant 0 : index
    %0 = vector.load %arg1[%c0, %c0_0, %c0_1] : memref<2x8x96xbf16, #tpu.memory_space<vmem>>, vector<2x8x8xbf16>
    %cst = arith.constant 3.535160e-01 : bf16
    %1 = vector.broadcast %cst : bf16 to vector<2x8x8xbf16>
    %2 = arith.mulf %0, %1 : vector<2x8x8xbf16>
    %c0_2 = arith.constant 0 : index
    %c0_3 = arith.constant 0 : index
    %c32 = arith.constant 32 : index
    %3 = vector.load %arg1[%c0_2, %c0_3, %c32] : memref<2x8x96xbf16, #tpu.memory_space<vmem>>, vector<2x8x8xbf16>
    %c0_4 = arith.constant 0 : index
    %c0_5 = arith.constant 0 : index
    %c64 = arith.constant 64 : index
    %4 = vector.load %arg1[%c0_4, %c0_5, %c64] : memref<2x8x96xbf16, #tpu.memory_space<vmem>>, vector<2x8x8xbf16>
    "tpu.trace_start"() <{level = 10 : i32, message = "bqd,bkd->bqk"}> : () -> ()
    %cst_6 = arith.constant dense<0.000000e+00> : vector<2x8x8xf32>
    %5 = tpu.matmul %2, %3, %cst_6 {dimension_numbers = #tpu.dot_dimension_numbers<[2], [2], [1], [1], [0, 0, 0, 1, 1, 1], [0], [0]>} : vector<2x8x8xbf16>, vector<2x8x8xbf16>, vector<2x8x8xf32> -> vector<2x8x8xf32>
    "tpu.trace_stop"() : () -> ()
    %cst_7 = arith.constant dense<0xFF800000> : vector<2x8xf32>
    %6 = vector.multi_reduction <maximumf>, %5, %cst_7 [2] : vector<2x8x8xf32> to vector<2x8xf32>
    %7 = vector.shape_cast %6 : vector<2x8xf32> to vector<2x8x1xf32>
    %8 = vector.broadcast %7 : vector<2x8x1xf32> to vector<2x8x8xf32>
    %9 = arith.subf %5, %8 : vector<2x8x8xf32>
    %10 = math.exp %9 : vector<2x8x8xf32>
    %cst_8 = arith.constant dense<0.000000e+00> : vector<2x8xf32>
    %11 = vector.multi_reduction <add>, %10, %cst_8 [2] : vector<2x8x8xf32> to vector<2x8xf32>
    %12 = vector.shape_cast %11 : vector<2x8xf32> to vector<2x8x1xf32>
    %13 = tpu.reciprocal %12 {approx = true} : vector<2x8x1xf32> -> vector<2x8x1xf32>
    %14 = vector.broadcast %13 : vector<2x8x1xf32> to vector<2x8x8xf32>
    %15 = arith.mulf %10, %14 : vector<2x8x8xf32>
    %16 = arith.truncf %15 : vector<2x8x8xf32> to vector<2x8x8xbf16>
    "tpu.trace_start"() <{level = 10 : i32, message = "bqk,bkd->bqd"}> : () -> ()
    %cst_9 = arith.constant dense<0.000000e+00> : vector<2x8x8xf32>
    %17 = tpu.matmul %16, %4, %cst_9 {dimension_numbers = #tpu.dot_dimension_numbers<[2], [1], [1], [2], [0, 0, 0, 1, 1, 2], [0], [0]>} : vector<2x8x8xbf16>, vector<2x8x8xbf16>, vector<2x8x8xf32> -> vector<2x8x8xf32>
    "tpu.trace_stop"() : () -> ()
    %18 = arith.truncf %17 : vector<2x8x8xf32> to vector<2x8x8xbf16>
    %c0_10 = arith.constant 0 : index
    %c0_11 = arith.constant 0 : index
    %c0_12 = arith.constant 0 : index
    %19 = vector.load %arg2[%c0_10, %c0_11, %c0_12] : memref<2x8x32xbf16, #tpu.memory_space<vmem>>, vector<2x8x8xbf16>
    tpu.vector_store %arg2[%c0_10, %c0_11, %c0_12], %18 {strides = array<i32>} : memref<2x8x32xbf16, #tpu.memory_space<vmem>>, vector<2x8x8xbf16>,
    %c0_13 = arith.constant 0 : index
    %c0_14 = arith.constant 0 : index
    %c8 = arith.constant 8 : index
    %20 = vector.load %arg1[%c0_13, %c0_14, %c8] : memref<2x8x96xbf16, #tpu.memory_space<vmem>>, vector<2x8x8xbf16>
    %cst_15 = arith.constant 3.535160e-01 : bf16
    %21 = vector.broadcast %cst_15 : bf16 to vector<2x8x8xbf16>
    %22 = arith.mulf %20, %21 : vector<2x8x8xbf16>
    %c0_16 = arith.constant 0 : index
    %c0_17 = arith.constant 0 : index
    %c40 = arith.constant 40 : index
    %23 = vector.load %arg1[%c0_16, %c0_17, %c40] : memref<2x8x96xbf16, #tpu.memory_space<vmem>>, vector<2x8x8xbf16>
    %c0_18 = arith.constant 0 : index
    %c0_19 = arith.constant 0 : index
    %c72 = arith.constant 72 : index
    %24 = vector.load %arg1[%c0_18, %c0_19, %c72] : memref<2x8x96xbf16, #tpu.memory_space<vmem>>, vector<2x8x8xbf16>
    "tpu.trace_start"() <{level = 10 : i32, message = "bqd,bkd->bqk"}> : () -> ()
    %cst_20 = arith.constant dense<0.000000e+00> : vector<2x8x8xf32>
    %25 = tpu.matmul %22, %23, %cst_20 {dimension_numbers = #tpu.dot_dimension_numbers<[2], [2], [1], [1], [0, 0, 0, 1, 1, 1], [0], [0]>} : vector<2x8x8xbf16>, vector<2x8x8xbf16>, vector<2x8x8xf32> -> vector<2x8x8xf32>
    "tpu.trace_stop"() : () -> ()
    %cst_21 = arith.constant dense<0xFF800000> : vector<2x8xf32>
    %26 = vector.multi_reduction <maximumf>, %25, %cst_21 [2] : vector<2x8x8xf32> to vector<2x8xf32>
    %27 = vector.shape_cast %26 : vector<2x8xf32> to vector<2x8x1xf32>
    %28 = vector.broadcast %27 : vector<2x8x1xf32> to vector<2x8x8xf32>
    %29 = arith.subf %25, %28 : vector<2x8x8xf32>
    %30 = math.exp %29 : vector<2x8x8xf32>
    %cst_22 = arith.constant dense<0.000000e+00> : vector<2x8xf32>
    %31 = vector.multi_reduction <add>, %30, %cst_22 [2] : vector<2x8x8xf32> to vector<2x8xf32>
    %32 = vector.shape_cast %31 : vector<2x8xf32> to vector<2x8x1xf32>
    %33 = tpu.reciprocal %32 {approx = true} : vector<2x8x1xf32> -> vector<2x8x1xf32>
    %34 = vector.broadcast %33 : vector<2x8x1xf32> to vector<2x8x8xf32>
    %35 = arith.mulf %30, %34 : vector<2x8x8xf32>
    %36 = arith.truncf %35 : vector<2x8x8xf32> to vector<2x8x8xbf16>
    "tpu.trace_start"() <{level = 10 : i32, message = "bqk,bkd->bqd"}> : () -> ()
    %cst_23 = arith.constant dense<0.000000e+00> : vector<2x8x8xf32>
    %37 = tpu.matmul %36, %24, %cst_23 {dimension_numbers = #tpu.dot_dimension_numbers<[2], [1], [1], [2], [0, 0, 0, 1, 1, 2], [0], [0]>} : vector<2x8x8xbf16>, vector<2x8x8xbf16>, vector<2x8x8xf32> -> vector<2x8x8xf32>
    "tpu.trace_stop"() : () -> ()
    %38 = arith.truncf %37 : vector<2x8x8xf32> to vector<2x8x8xbf16>
    %c0_24 = arith.constant 0 : index
    %c0_25 = arith.constant 0 : index
    %c8_26 = arith.constant 8 : index
    %39 = vector.load %arg2[%c0_24, %c0_25, %c8_26] : memref<2x8x32xbf16, #tpu.memory_space<vmem>>, vector<2x8x8xbf16>
    tpu.vector_store %arg2[%c0_24, %c0_25, %c8_26], %38 {strides = array<i32>} : memref<2x8x32xbf16, #tpu.memory_space<vmem>>, vector<2x8x8xbf16>,
    %c0_27 = arith.constant 0 : index
    %c0_28 = arith.constant 0 : index
    %c16 = arith.constant 16 : index
    %40 = vector.load %arg1[%c0_27, %c0_28, %c16] : memref<2x8x96xbf16, #tpu.memory_space<vmem>>, vector<2x8x8xbf16>
    %cst_29 = arith.constant 3.535160e-01 : bf16
    %41 = vector.broadcast %cst_29 : bf16 to vector<2x8x8xbf16>
    %42 = arith.mulf %40, %41 : vector<2x8x8xbf16>
    %c0_30 = arith.constant 0 : index
    %c0_31 = arith.constant 0 : index
    %c48 = arith.constant 48 : index
    %43 = vector.load %arg1[%c0_30, %c0_31, %c48] : memref<2x8x96xbf16, #tpu.memory_space<vmem>>, vector<2x8x8xbf16>
    %c0_32 = arith.constant 0 : index
    %c0_33 = arith.constant 0 : index
    %c80 = arith.constant 80 : index
    %44 = vector.load %arg1[%c0_32, %c0_33, %c80] : memref<2x8x96xbf16, #tpu.memory_space<vmem>>, vector<2x8x8xbf16>
    "tpu.trace_start"() <{level = 10 : i32, message = "bqd,bkd->bqk"}> : () -> ()
    %cst_34 = arith.constant dense<0.000000e+00> : vector<2x8x8xf32>
    %45 = tpu.matmul %42, %43, %cst_34 {dimension_numbers = #tpu.dot_dimension_numbers<[2], [2], [1], [1], [0, 0, 0, 1, 1, 1], [0], [0]>} : vector<2x8x8xbf16>, vector<2x8x8xbf16>, vector<2x8x8xf32> -> vector<2x8x8xf32>
    "tpu.trace_stop"() : () -> ()
    %cst_35 = arith.constant dense<0xFF800000> : vector<2x8xf32>
    %46 = vector.multi_reduction <maximumf>, %45, %cst_35 [2] : vector<2x8x8xf32> to vector<2x8xf32>
    %47 = vector.shape_cast %46 : vector<2x8xf32> to vector<2x8x1xf32>
    %48 = vector.broadcast %47 : vector<2x8x1xf32> to vector<2x8x8xf32>
    %49 = arith.subf %45, %48 : vector<2x8x8xf32>
    %50 = math.exp %49 : vector<2x8x8xf32>
    %cst_36 = arith.constant dense<0.000000e+00> : vector<2x8xf32>
    %51 = vector.multi_reduction <add>, %50, %cst_36 [2] : vector<2x8x8xf32> to vector<2x8xf32>
    %52 = vector.shape_cast %51 : vector<2x8xf32> to vector<2x8x1xf32>
    %53 = tpu.reciprocal %52 {approx = true} : vector<2x8x1xf32> -> vector<2x8x1xf32>
    %54 = vector.broadcast %53 : vector<2x8x1xf32> to vector<2x8x8xf32>
    %55 = arith.mulf %50, %54 : vector<2x8x8xf32>
    %56 = arith.truncf %55 : vector<2x8x8xf32> to vector<2x8x8xbf16>
    "tpu.trace_start"() <{level = 10 : i32, message = "bqk,bkd->bqd"}> : () -> ()
    %cst_37 = arith.constant dense<0.000000e+00> : vector<2x8x8xf32>
    %57 = tpu.matmul %56, %44, %cst_37 {dimension_numbers = #tpu.dot_dimension_numbers<[2], [1], [1], [2], [0, 0, 0, 1, 1, 2], [0], [0]>} : vector<2x8x8xbf16>, vector<2x8x8xbf16>, vector<2x8x8xf32> -> vector<2x8x8xf32>
    "tpu.trace_stop"() : () -> ()
    %58 = arith.truncf %57 : vector<2x8x8xf32> to vector<2x8x8xbf16>
    %c0_38 = arith.constant 0 : index
    %c0_39 = arith.constant 0 : index
    %c16_40 = arith.constant 16 : index
    %59 = vector.load %arg2[%c0_38, %c0_39, %c16_40] : memref<2x8x32xbf16, #tpu.memory_space<vmem>>, vector<2x8x8xbf16>
    tpu.vector_store %arg2[%c0_38, %c0_39, %c16_40], %58 {strides = array<i32>} : memref<2x8x32xbf16, #tpu.memory_space<vmem>>, vector<2x8x8xbf16>,
    %c0_41 = arith.constant 0 : index
    %c0_42 = arith.constant 0 : index
    %c24 = arith.constant 24 : index
    %60 = vector.load %arg1[%c0_41, %c0_42, %c24] : memref<2x8x96xbf16, #tpu.memory_space<vmem>>, vector<2x8x8xbf16>
    %cst_43 = arith.constant 3.535160e-01 : bf16
    %61 = vector.broadcast %cst_43 : bf16 to vector<2x8x8xbf16>
    %62 = arith.mulf %60, %61 : vector<2x8x8xbf16>
    %c0_44 = arith.constant 0 : index
    %c0_45 = arith.constant 0 : index
    %c56 = arith.constant 56 : index
    %63 = vector.load %arg1[%c0_44, %c0_45, %c56] : memref<2x8x96xbf16, #tpu.memory_space<vmem>>, vector<2x8x8xbf16>
    %c0_46 = arith.constant 0 : index
    %c0_47 = arith.constant 0 : index
    %c88 = arith.constant 88 : index
    %64 = vector.load %arg1[%c0_46, %c0_47, %c88] : memref<2x8x96xbf16, #tpu.memory_space<vmem>>, vector<2x8x8xbf16>
    "tpu.trace_start"() <{level = 10 : i32, message = "bqd,bkd->bqk"}> : () -> ()
    %cst_48 = arith.constant dense<0.000000e+00> : vector<2x8x8xf32>
    %65 = tpu.matmul %62, %63, %cst_48 {dimension_numbers = #tpu.dot_dimension_numbers<[2], [2], [1], [1], [0, 0, 0, 1, 1, 1], [0], [0]>} : vector<2x8x8xbf16>, vector<2x8x8xbf16>, vector<2x8x8xf32> -> vector<2x8x8xf32>
    "tpu.trace_stop"() : () -> ()
    %cst_49 = arith.constant dense<0xFF800000> : vector<2x8xf32>
    %66 = vector.multi_reduction <maximumf>, %65, %cst_49 [2] : vector<2x8x8xf32> to vector<2x8xf32>
    %67 = vector.shape_cast %66 : vector<2x8xf32> to vector<2x8x1xf32>
    %68 = vector.broadcast %67 : vector<2x8x1xf32> to vector<2x8x8xf32>
    %69 = arith.subf %65, %68 : vector<2x8x8xf32>
    %70 = math.exp %69 : vector<2x8x8xf32>
    %cst_50 = arith.constant dense<0.000000e+00> : vector<2x8xf32>
    %71 = vector.multi_reduction <add>, %70, %cst_50 [2] : vector<2x8x8xf32> to vector<2x8xf32>
    %72 = vector.shape_cast %71 : vector<2x8xf32> to vector<2x8x1xf32>
    %73 = tpu.reciprocal %72 {approx = true} : vector<2x8x1xf32> -> vector<2x8x1xf32>
    %74 = vector.broadcast %73 : vector<2x8x1xf32> to vector<2x8x8xf32>
    %75 = arith.mulf %70, %74 : vector<2x8x8xf32>
    %76 = arith.truncf %75 : vector<2x8x8xf32> to vector<2x8x8xbf16>
    "tpu.trace_start"() <{level = 10 : i32, message = "bqk,bkd->bqd"}> : () -> ()
    %cst_51 = arith.constant dense<0.000000e+00> : vector<2x8x8xf32>
    %77 = tpu.matmul %76, %64, %cst_51 {dimension_numbers = #tpu.dot_dimension_numbers<[2], [1], [1], [2], [0, 0, 0, 1, 1, 2], [0], [0]>} : vector<2x8x8xbf16>, vector<2x8x8xbf16>, vector<2x8x8xf32> -> vector<2x8x8xf32>
    "tpu.trace_stop"() : () -> ()
    %78 = arith.truncf %77 : vector<2x8x8xf32> to vector<2x8x8xbf16>
    %c0_52 = arith.constant 0 : index
    %c0_53 = arith.constant 0 : index
    %c24_54 = arith.constant 24 : index
    %79 = vector.load %arg2[%c0_52, %c0_53, %c24_54] : memref<2x8x32xbf16, #tpu.memory_space<vmem>>, vector<2x8x8xbf16>
    tpu.vector_store %arg2[%c0_52, %c0_53, %c24_54], %78 {strides = array<i32>} : memref<2x8x32xbf16, #tpu.memory_space<vmem>>, vector<2x8x8xbf16>,
    return
  }
  func.func @transform_0(%arg0: i32) -> (i32, i32, i32) {
    %c0_i32 = arith.constant 0 : i32
    %c0_i32_0 = arith.constant 0 : i32
    %c0_i32_1 = arith.constant 0 : i32
    return %arg0, %c0_i32, %c0_i32_0 : i32, i32, i32
  }
  func.func @transform_1(%arg0: i32) -> (i32, i32, i32) {
    %c0_i32 = arith.constant 0 : i32
    %c0_i32_0 = arith.constant 0 : i32
    %c0_i32_1 = arith.constant 0 : i32
    return %arg0, %c0_i32, %c0_i32_0 : i32, i32, i32
  }
}

module attributes {stable_mosaic.version = 11 : i64} {
  func.func @_gaussian_combine_kernel(%arg0: i32, %arg1: memref<16x32xbf16, #tpu.memory_space<vmem>>, %arg2: memref<32x64xbf16, #tpu.memory_space<vmem>>, %arg3: memref<1x64xf32, #tpu.memory_space<vmem>>, %arg4: memref<16x32xbf16, #tpu.memory_space<vmem>>, %arg5: memref<16x32xbf16, #tpu.memory_space<vmem>>, %arg6: memref<16x1xf32, #tpu.memory_space<vmem>>) attributes {dimension_semantics = [#tpu.dimension_semantics<parallel>], iteration_bounds = array<i64: 1>, scalar_prefetch = 0 : i64, scratch_operands = 0 : i64, tpu.core_type = #tpu.core_type<tc>, window_params = [{transform_indices = @transform_0, window_bounds = array<i64: 16, 32>}, {pipeline_mode = #tpu.pipeline_mode<synchronous>, transform_indices = @transform_1, window_bounds = array<i64: 32, 64>}, {pipeline_mode = #tpu.pipeline_mode<synchronous>, transform_indices = @transform_2, window_bounds = array<i64: 1, 64>}, {transform_indices = @transform_3, window_bounds = array<i64: 16, 32>}, {transform_indices = @transform_4, window_bounds = array<i64: 16, 32>}, {transform_indices = @transform_5, window_bounds = array<i64: 16, 1>}]} {
    %c0 = arith.constant 0 : index
    %c0_0 = arith.constant 0 : index
    %0 = vector.load %arg1[%c0, %c0_0] : memref<16x32xbf16, #tpu.memory_space<vmem>>, vector<16x32xbf16>
    %c0_1 = arith.constant 0 : index
    %c0_2 = arith.constant 0 : index
    %1 = vector.load %arg2[%c0_1, %c0_2] : memref<32x64xbf16, #tpu.memory_space<vmem>>, vector<32x64xbf16>
    %cst = arith.constant dense<0.000000e+00> : vector<16x64xf32>
    %2 = tpu.matmul %0, %1, %cst {dimension_numbers = #tpu.dot_dimension_numbers<[1], [0], [0], [1], [0, 0, 1, 1], [], []>} : vector<16x32xbf16>, vector<32x64xbf16>, vector<16x64xf32> -> vector<16x64xf32>
    %c0_3 = arith.constant 0 : index
    %c0_4 = arith.constant 0 : index
    %3 = vector.load %arg3[%c0_3, %c0_4] : memref<1x64xf32, #tpu.memory_space<vmem>>, vector<1x64xf32>
    %4 = vector.broadcast %3 : vector<1x64xf32> to vector<16x64xf32>
    %5 = arith.addf %2, %4 : vector<16x64xf32>
    %6 = vector.extract_strided_slice %5 {offsets = [0, 0], sizes = [16, 32], strides = [1, 1]} : vector<16x64xf32> to vector<16x32xf32>
    %7 = vector.extract_strided_slice %5 {offsets = [0, 32], sizes = [16, 32], strides = [1, 1]} : vector<16x64xf32> to vector<16x32xf32>
    %cst_5 = arith.constant 5.000000e-01 : f32
    %8 = vector.broadcast %cst_5 : f32 to vector<16x32xf32>
    %9 = arith.mulf %8, %7 : vector<16x32xf32>
    %10 = math.exp %9 : vector<16x32xf32>
    %c0_6 = arith.constant 0 : index
    %c0_7 = arith.constant 0 : index
    %11 = vector.load %arg4[%c0_6, %c0_7] : memref<16x32xbf16, #tpu.memory_space<vmem>>, vector<16x32xbf16>
    %12 = arith.extf %11 : vector<16x32xbf16> to vector<16x32xf32>
    %13 = arith.mulf %12, %10 : vector<16x32xf32>
    %14 = arith.addf %6, %13 : vector<16x32xf32>
    %cst_8 = arith.constant dense<0.000000e+00> : vector<16xf32>
    %15 = vector.multi_reduction <add>, %7, %cst_8 [1] : vector<16x32xf32> to vector<16xf32>
    %16 = vector.shape_cast %15 : vector<16xf32> to vector<16x1xf32>
    %cst_9 = arith.constant 3.200000e+01 : f32
    %17 = vector.broadcast %cst_9 : f32 to vector<16x1xf32>
    %18 = arith.divf %16, %17 : vector<16x1xf32>
    %cst_10 = arith.constant 1.000000e+00 : f32
    %19 = vector.broadcast %cst_10 : f32 to vector<16x1xf32>
    %20 = arith.subf %19, %18 : vector<16x1xf32>
    %21 = arith.extf %0 : vector<16x32xbf16> to vector<16x32xf32>
    %22 = arith.subf %14, %21 : vector<16x32xf32>
    %23 = vector.broadcast %20 : vector<16x1xf32> to vector<16x32xf32>
    %24 = arith.mulf %23, %22 : vector<16x32xf32>
    %25 = arith.addf %21, %24 : vector<16x32xf32>
    %26 = arith.truncf %25 : vector<16x32xf32> to vector<16x32xbf16>
    %c0_11 = arith.constant 0 : index
    %c0_12 = arith.constant 0 : index
    %27 = vector.load %arg5[%c0_11, %c0_12] : memref<16x32xbf16, #tpu.memory_space<vmem>>, vector<16x32xbf16>
    tpu.vector_store %arg5[%c0_11, %c0_12], %26 {strides = array<i32>} : memref<16x32xbf16, #tpu.memory_space<vmem>>, vector<16x32xbf16>,
    %c0_13 = arith.constant 0 : index
    %c0_14 = arith.constant 0 : index
    %28 = vector.load %arg6[%c0_13, %c0_14] : memref<16x1xf32, #tpu.memory_space<vmem>>, vector<16x1xf32>
    tpu.vector_store %arg6[%c0_13, %c0_14], %18 {strides = array<i32>} : memref<16x1xf32, #tpu.memory_space<vmem>>, vector<16x1xf32>,
    return
  }
  func.func @transform_0(%arg0: i32) -> (i32, i32) {
    %c0_i32 = arith.constant 0 : i32
    %c0_i32_0 = arith.constant 0 : i32
    return %arg0, %c0_i32 : i32, i32
  }
  func.func @transform_1(%arg0: i32) -> (i32, i32) {
    %c0_i32 = arith.constant 0 : i32
    %c0_i32_0 = arith.constant 0 : i32
    %c0_i32_1 = arith.constant 0 : i32
    return %c0_i32, %c0_i32_0 : i32, i32
  }
  func.func @transform_2(%arg0: i32) -> (i32, i32) {
    %c0_i32 = arith.constant 0 : i32
    %c0_i32_0 = arith.constant 0 : i32
    %c0_i32_1 = arith.constant 0 : i32
    return %c0_i32, %c0_i32_0 : i32, i32
  }
  func.func @transform_3(%arg0: i32) -> (i32, i32) {
    %c0_i32 = arith.constant 0 : i32
    %c0_i32_0 = arith.constant 0 : i32
    return %arg0, %c0_i32 : i32, i32
  }
  func.func @transform_4(%arg0: i32) -> (i32, i32) {
    %c0_i32 = arith.constant 0 : i32
    %c0_i32_0 = arith.constant 0 : i32
    return %arg0, %c0_i32 : i32, i32
  }
  func.func @transform_5(%arg0: i32) -> (i32, i32) {
    %c0_i32 = arith.constant 0 : i32
    %c0_i32_0 = arith.constant 0 : i32
    return %arg0, %c0_i32 : i32, i32
  }
}

module attributes {stable_mosaic.version = 11 : i64} {
  func.func @_matmul_kernel(%arg0: i32, %arg1: i32, %arg2: i32, %arg3: memref<16x32xbf16, #tpu.memory_space<vmem>>, %arg4: memref<32x128xbf16, #tpu.memory_space<vmem>>, %arg5: memref<1x128xf32, #tpu.memory_space<vmem>>, %arg6: memref<16x128xf32, #tpu.memory_space<vmem>>, %arg7: memref<16x128xf32, #tpu.memory_space<vmem>>) attributes {dimension_semantics = [#tpu.dimension_semantics<parallel>, #tpu.dimension_semantics<parallel>, #tpu.dimension_semantics<arbitrary>], iteration_bounds = array<i64: 1, 1, 1>, scalar_prefetch = 0 : i64, scratch_operands = 1 : i64, tpu.core_type = #tpu.core_type<tc>, window_params = [{transform_indices = @transform_0, window_bounds = array<i64: 16, 32>}, {transform_indices = @transform_1, window_bounds = array<i64: 32, 128>}, {transform_indices = @transform_2, window_bounds = array<i64: 1, 128>}, {transform_indices = @transform_3, window_bounds = array<i64: 16, 128>}]} {
    %c0_i32 = arith.constant 0 : i32
    %0 = arith.cmpi eq, %arg2, %c0_i32 : i32
    %1 = arith.extui %0 : i1 to i32
    %c0_i32_0 = arith.constant 0 : i32
    %2 = arith.cmpi ne, %1, %c0_i32_0 : i32
    scf.if %2 {
      %cst_10 = arith.constant 0.000000e+00 : f32
      %12 = vector.broadcast %cst_10 : f32 to vector<16x128xf32>
      %c0_11 = arith.constant 0 : index
      %c0_12 = arith.constant 0 : index
      %13 = vector.load %arg7[%c0_11, %c0_12] : memref<16x128xf32, #tpu.memory_space<vmem>>, vector<16x128xf32>
      tpu.vector_store %arg7[%c0_11, %c0_12], %12 {strides = array<i32>} : memref<16x128xf32, #tpu.memory_space<vmem>>, vector<16x128xf32>,
    } else {
    }
    %c0 = arith.constant 0 : index
    %c0_1 = arith.constant 0 : index
    %3 = vector.load %arg7[%c0, %c0_1] : memref<16x128xf32, #tpu.memory_space<vmem>>, vector<16x128xf32>
    %c0_2 = arith.constant 0 : index
    %c0_3 = arith.constant 0 : index
    %4 = vector.load %arg3[%c0_2, %c0_3] : memref<16x32xbf16, #tpu.memory_space<vmem>>, vector<16x32xbf16>
    %c0_4 = arith.constant 0 : index
    %c0_5 = arith.constant 0 : index
    %5 = vector.load %arg4[%c0_4, %c0_5] : memref<32x128xbf16, #tpu.memory_space<vmem>>, vector<32x128xbf16>
    %cst = arith.constant dense<0.000000e+00> : vector<16x128xf32>
    %6 = tpu.matmul %4, %5, %cst {dimension_numbers = #tpu.dot_dimension_numbers<[1], [0], [0], [1], [0, 0, 1, 1], [], []>} : vector<16x32xbf16>, vector<32x128xbf16>, vector<16x128xf32> -> vector<16x128xf32>
    %7 = arith.addf %3, %6 : vector<16x128xf32>
    %c0_6 = arith.constant 0 : index
    %c0_7 = arith.constant 0 : index
    %8 = vector.load %arg7[%c0_6, %c0_7] : memref<16x128xf32, #tpu.memory_space<vmem>>, vector<16x128xf32>
    tpu.vector_store %arg7[%c0_6, %c0_7], %7 {strides = array<i32>} : memref<16x128xf32, #tpu.memory_space<vmem>>, vector<16x128xf32>,
    %c0_i32_8 = arith.constant 0 : i32
    %9 = arith.cmpi eq, %arg2, %c0_i32_8 : i32
    %10 = arith.extui %9 : i1 to i32
    %c0_i32_9 = arith.constant 0 : i32
    %11 = arith.cmpi ne, %10, %c0_i32_9 : i32
    scf.if %11 {
      %c0_10 = arith.constant 0 : index
      %c0_11 = arith.constant 0 : index
      %12 = vector.load %arg7[%c0_10, %c0_11] : memref<16x128xf32, #tpu.memory_space<vmem>>, vector<16x128xf32>
      %c0_12 = arith.constant 0 : index
      %c0_13 = arith.constant 0 : index
      %13 = vector.load %arg5[%c0_12, %c0_13] : memref<1x128xf32, #tpu.memory_space<vmem>>, vector<1x128xf32>
      %14 = vector.broadcast %13 : vector<1x128xf32> to vector<16x128xf32>
      %15 = arith.addf %12, %14 : vector<16x128xf32>
      %c0_14 = arith.constant 0 : index
      %c0_15 = arith.constant 0 : index
      %16 = vector.load %arg6[%c0_14, %c0_15] : memref<16x128xf32, #tpu.memory_space<vmem>>, vector<16x128xf32>
      tpu.vector_store %arg6[%c0_14, %c0_15], %15 {strides = array<i32>} : memref<16x128xf32, #tpu.memory_space<vmem>>, vector<16x128xf32>,
    } else {
    }
    return
  }
  func.func @transform_0(%arg0: i32, %arg1: i32, %arg2: i32) -> (i32, i32) {
    %c0_i32 = arith.constant 0 : i32
    return %arg0, %arg2 : i32, i32
  }
  func.func @transform_1(%arg0: i32, %arg1: i32, %arg2: i32) -> (i32, i32) {
    %c0_i32 = arith.constant 0 : i32
    return %arg2, %arg1 : i32, i32
  }
  func.func @transform_2(%arg0: i32, %arg1: i32, %arg2: i32) -> (i32, i32) {
    %c0_i32 = arith.constant 0 : i32
    %c0_i32_0 = arith.constant 0 : i32
    return %c0_i32, %arg1 : i32, i32
  }
  func.func @transform_3(%arg0: i32, %arg1: i32, %arg2: i32) -> (i32, i32) {
    %c0_i32 = arith.constant 0 : i32
    return %arg0, %arg1 : i32, i32
  }
}

</mosaic_0001>

<llo_original>
// kernel: gaussian_transformer_llm.12
$region0: #{gaussian_transformer_llm.12}
  #allocation0 [shape = 'u32[]', space=smem, size = 0x4, offset = 0x4, fixed_abs, tag = 'smem constant byte address 0x4 - core index']
  #allocation1 [shape = 'u32[144,128]{1,0:T(1,128)}', space=vmem, size = 0x12000, scoped, tag = 'internal scratch']
  %s0 = inlined_call_operand.vmem [shape: bf16[16,32], index: 0, kind: input, shape index: {}]
  %s1 = inlined_call_operand.vmem [shape: bf16[16,32], index: 1, kind: input, shape index: {}]
  %s2 = inlined_call_operand.vmem [shape: bf16[32,32], index: 2, kind: input, shape index: {}]
  %s3 = inlined_call_operand.vmem [shape: f32[1,32], index: 3, kind: input, shape index: {}]
  %s4 = inlined_call_operand.vmem [shape: f32[1,32], index: 4, kind: input, shape index: {}]
  %s5 = inlined_call_operand.vmem [shape: f32[1,32], index: 5, kind: input, shape index: {}]
  %s6 = inlined_call_operand.vmem [shape: bf16[16,32], index: 6, kind: output, shape index: {}]
  %s7 = sld [smem:[#allocation0]]
  $region34: #{gaussian_transformer_llm.12} parent=0
    _
  %s9 = ssub.s32 1, %s7
  %s10 = scalar_select 0, %s9, %s7
  // Predicated region
  $region2: #{gaussian_transformer_llm.12} parent=0 // pred_check
    _
  $region3: #{gaussian_transformer_llm.12} parent=0 // pred_check_branch
    %12 = sbr.rel (0) target = $region5
  $region4: #{gaussian_transformer_llm.12} parent=0 // pred_region
    _
  $region5: #{gaussian_transformer_llm.12} parent=0 // pred_fallthru
    _
  // Predicated region
  $region6: #{gaussian_transformer_llm.12} parent=0 // pred_check
    _
  $region7: #{gaussian_transformer_llm.12} parent=0 // pred_check_branch
    %14 = sbr.rel (0) target = $region9
  $region8: #{gaussian_transformer_llm.12} parent=0 // pred_region
    _
  $region9: #{gaussian_transformer_llm.12} parent=0 // pred_fallthru
    _
  // Predicated region
  $region10: #{gaussian_transformer_llm.12} parent=0 // pred_check
    _
  $region11: #{gaussian_transformer_llm.12} parent=0 // pred_check_branch
    %16 = sbr.rel (0) target = $region13
  $region12: #{gaussian_transformer_llm.12} parent=0 // pred_region
    _
  $region13: #{gaussian_transformer_llm.12} parent=0 // pred_fallthru
    _
  // Predicated region
  $region14: #{gaussian_transformer_llm.12} parent=0 // pred_check
    _
  $region15: #{gaussian_transformer_llm.12} parent=0 // pred_check_branch
    %18 = sbr.rel (0) target = $region17
  $region16: #{gaussian_transformer_llm.12} parent=0 // pred_region
    _
  $region17: #{gaussian_transformer_llm.12} parent=0 // pred_fallthru
    _
  // Predicated region
  $region18: #{gaussian_transformer_llm.12} parent=0 // pred_check
    _
  $region19: #{gaussian_transformer_llm.12} parent=0 // pred_check_branch
    %20 = sbr.rel (0) target = $region21
  $region20: #{gaussian_transformer_llm.12} parent=0 // pred_region
    _
  $region21: #{gaussian_transformer_llm.12} parent=0 // pred_fallthru
    _
  // Predicated region
  $region22: #{gaussian_transformer_llm.12} parent=0 // pred_check
    _
  $region23: #{gaussian_transformer_llm.12} parent=0 // pred_check_branch
    %22 = sbr.rel (0) target = $region25
  $region24: #{gaussian_transformer_llm.12} parent=0 // pred_region
    _
  $region25: #{gaussian_transformer_llm.12} parent=0 // pred_fallthru
    _
  %v24 = vld [vmem:[%s0] sm:$0xf]
  %v25 = vld [vmem:[%s0 + $0x4] sm:$0xf]
  %v26 = vld [vmem:[%s2] sm:$0xf]
  %v27 = vld [vmem:[%s2 + $0x4] sm:$0xf]
  %v28 = vld [vmem:[%s2 + $0x8] sm:$0xf]
  %v29 = vld [vmem:[%s2 + $0xc] sm:$0xf]
  %v30 = vld [vmem:[%s3] sm:$0x1]
  %v32 = vlaneseq
  %v33 = vshrl.u32 %v32, 7
  %v34 = vsub.s32 0, %v33
  %v35 = vrot.slane %v30, %v34
  %v39 = vunpack.c.l.b16 %v24
  %v40 = vunpack.c.l.b16 %v25
  %v41 = vpack.c.b16 %v40, %v39
  %v46 = vunpack.c.l.b16 %v26
  %v47 = vunpack.c.l.b16 %v27
  %v48 = vunpack.c.l.b16 %v28
  %v49 = vunpack.c.l.b16 %v29
  %v50 = vpack.c.b16 %v47, %v46
  %v51 = vpack.c.b16 %v49, %v48
  %vm54 = vcmask 261120
  %v56 = vsel %vm54, %v41, 0
  %58 = vmatprep.subr.bf16.mxu0 0
  %59 = vmatpush1.bf16.msra.mxu0 0
  %60 = vmatprep.subr.bf16.mxu0 0
  %61 = vmatpush1.bf16.msra.mxu0 0
  %62 = vmatprep.subr.bf16.mxu0 0
  %63 = vmatpush1.bf16.msra.mxu0 0
  %64 = vmatprep.subr.bf16.mxu0 0
  %65 = vmatpush1.bf16.msra.mxu0 0
  %66 = vmatprep.subr.bf16.mxu0 0
  %67 = vmatpush1.bf16.msra.mxu0 0
  %68 = vmatprep.subr.bf16.mxu0 0
  %69 = vmatpush1.bf16.msra.mxu0 0
  %70 = vmatprep.subr.bf16.mxu0 0
  %71 = vmatpush1.bf16.msra.mxu0 %v51
  %72 = vmatprep.subr.bf16.mxu0 0
  %73 = vmatpush1.bf16.msra.mxu0 %v50
  %74 = vmatprep.subr.bf16.mxu0 0
  %75 = vmatpush2.bf16.msra.mxu0 0
  %76 = vmatprep.subr.bf16.mxu0 0
  %77 = vmatpush2.bf16.msra.mxu0 0
  %78 = vmatprep.subr.bf16.mxu0 0
  %79 = vmatpush2.bf16.msra.mxu0 0
  %80 = vmatprep.subr.bf16.mxu0 0
  %81 = vmatpush2.bf16.msra.mxu0 0
  %82 = vmatprep.subr.bf16.mxu0 0
  %83 = vmatpush2.bf16.msra.mxu0 0
  %84 = vmatprep.subr.bf16.mxu0 0
  %85 = vmatpush2.bf16.msra.mxu0 0
  %86 = vmatprep.subr.bf16.mxu0 0
  %87 = vmatpush2.bf16.msra.mxu0 0
  %88 = vmatprep.subr.bf16.mxu0 0
  %89 = vmatpush2.bf16.msra.mxu0 0
  %90 = vmatprep.mubr.bf16.mxu0 0
  %91 = vmatmul.mubr.bf16.gmra.mxu0 %v56
  %v92 = vpop.f32.mrf.mxu0
  %v93 = vadd.f32 %v35, %v92
  %v94 = vpop.f32.mrf.mxu0
  %v95 = vpop.f32.mrf.mxu0
  %v96 = vadd.f32 %v35, %v95
  %v97 = vpop.f32.mrf.mxu0
  %98 = vdwg.mxu0
  %v99 = vld [vmem:[%s1] sm:$0xf]
  %v100 = vld [vmem:[%s1 + $0x4] sm:$0xf]
  %v101 = vunpack.c.l.bf16 %v99
  %v102 = vunpack.c.l.bf16 %v100
  %v103 = vadd.f32 %v101, %v93
  %v104 = vadd.f32 %v102, %v96
  %v105 = vsel %vm54, %v103, 0.0
  %106 = vadd.xlane.f32.xlu0 %v105
  %v107 = vpop.xlane.xlu0 %106
  %v108 = vsel %vm54, %v104, 0.0
  %109 = vadd.xlane.f32.xlu0 %v108
  %v110 = vpop.xlane.xlu0 %109
  %v111 = vrcp.pop 32.0
  %v112 = vmul.f32 %v107, %v111
  %v113 = vmul.f32 %v110, %v111
  %v114 = vsub.f32 %v103, %v112
  %v115 = vsub.f32 %v104, %v113
  %v116 = vmul.f32 %v114, %v114
  %v117 = vmul.f32 %v115, %v115
  %v118 = vsel %vm54, %v116, 0.0
  %119 = vadd.xlane.f32.xlu0 %v118
  %v120 = vpop.xlane.xlu0 %119
  %v121 = vsel %vm54, %v117, 0.0
  %122 = vadd.xlane.f32.xlu0 %v121
  %v123 = vpop.xlane.xlu0 %122
  %v124 = vmul.f32 %v120, %v111
  %v125 = vmul.f32 %v123, %v111
  %v126 = vadd.f32 %v124, 1e-05
  %v127 = vadd.f32 %v125, 1e-05
  %v128 = vrsqrt.pop %v126
  %v129 = vrsqrt.pop %v127
  %v130 = vmul.f32 %v114, %v128
  %v131 = vmul.f32 %v115, %v129
  %v132 = vld [vmem:[%s4] sm:$0x1]
  %v134 = vlaneseq
  %v135 = vshrl.u32 %v134, 7
  %v136 = vsub.s32 0, %v135
  %v137 = vrot.slane %v132, %v136
  %v139 = vmul.f32 %v130, %v137
  %v140 = vmul.f32 %v131, %v137
  %v141 = vld [vmem:[%s5] sm:$0x1]
  %v143 = vlaneseq
  %v144 = vshrl.u32 %v143, 7
  %v145 = vsub.s32 0, %v144
  %v146 = vrot.slane %v141, %v145
  %v148 = vadd.f32 %v139, %v146
  %v149 = vadd.f32 %v140, %v146
  %v150 = vpack.c.bf16 %v149, %v148
  %v152 = vunpack.c.l.b16 %v150
  %v153 = vunpack.c.h.b16 %v150
  %v154 = vpack.c.b16 %v152, %v152
  %v155 = vpack.c.b16 %v153, %v153
  %vm158 = vcmask 257024
  %159 = vst.msk [vmem:[%s6] sm:$0xf] %vm158, %v154
  %160 = vst.msk [vmem:[%s6 + $0x4] sm:$0xf] %vm158, %v155
  // Predicated region
  $region26: #{gaussian_transformer_llm.12} parent=0 // pred_check
    _
  $region27: #{gaussian_transformer_llm.12} parent=0 // pred_check_branch
    %162 = sbr.rel (0) target = $region29
  $region28: #{gaussian_transformer_llm.12} parent=0 // pred_region
    _
  $region29: #{gaussian_transformer_llm.12} parent=0 // pred_fallthru
    _
  // Predicated region
  $region30: #{gaussian_transformer_llm.12} parent=0 // pred_check
    _
  $region31: #{gaussian_transformer_llm.12} parent=0 // pred_check_branch
    %164 = sbr.rel (0) target = $region33
  $region32: #{gaussian_transformer_llm.12} parent=0 // pred_region
    _
  $region33: #{gaussian_transformer_llm.12} parent=0 // pred_fallthru
    _

// kernel: gaussian_transformer_llm.10
$region0: #{gaussian_transformer_llm.10}
  #allocation0 [shape = 'u32[]', space=smem, size = 0x4, offset = 0x4, fixed_abs, tag = 'smem constant byte address 0x4 - core index']
  #allocation1 [shape = 'u32[144,128]{1,0:T(1,128)}', space=vmem, size = 0x12000, scoped, tag = 'internal scratch']
  #allocation2 [shape = 'f32[16,96]{1,0:T(8,128)}', space=vmem, size = 0x2000, scoped, tag = 'scratch operand']
  %s0 = inlined_call_operand.vmem [shape: bf16[16,32], index: 0, kind: input, shape index: {}]
  %s1 = inlined_call_operand.vmem [shape: bf16[32,96], index: 1, kind: input, shape index: {}]
  %s2 = inlined_call_operand.vmem [shape: f32[1,96], index: 2, kind: input, shape index: {}]
  %s3 = inlined_call_operand.vmem [shape: bf16[16,96], index: 3, kind: output, shape index: {}]
  %s4 = sld [smem:[#allocation0]]
  $region30: #{gaussian_transformer_llm.10} parent=0
    _
  %s6 = ssub.s32 1, %s4
  %s7 = scalar_select 0, %s6, %s4
  // Predicated region
  $region2: #{gaussian_transformer_llm.10} parent=0 // pred_check
    _
  $region3: #{gaussian_transformer_llm.10} parent=0 // pred_check_branch
    %9 = sbr.rel (0) target = $region5
  $region4: #{gaussian_transformer_llm.10} parent=0 // pred_region
    _
  $region5: #{gaussian_transformer_llm.10} parent=0 // pred_fallthru
    _
  // Predicated region
  $region6: #{gaussian_transformer_llm.10} parent=0 // pred_check
    _
  $region7: #{gaussian_transformer_llm.10} parent=0 // pred_check_branch
    %11 = sbr.rel (0) target = $region9
  $region8: #{gaussian_transformer_llm.10} parent=0 // pred_region
    _
  $region9: #{gaussian_transformer_llm.10} parent=0 // pred_fallthru
    _
  // Predicated region
  $region10: #{gaussian_transformer_llm.10} parent=0 // pred_check
    _
  $region11: #{gaussian_transformer_llm.10} parent=0 // pred_check_branch
    %13 = sbr.rel (0) target = $region13
  $region12: #{gaussian_transformer_llm.10} parent=0 // pred_region
    _
  $region13: #{gaussian_transformer_llm.10} parent=0 // pred_fallthru
    _
  %p15 = scmp.eq.s32.totalorder 0, 0
  // Predicated region
  $region14: #{gaussian_transformer_llm.10} parent=0 // pred_check
    %p16 = pneg %p15
  $region15: #{gaussian_transformer_llm.10} parent=0 // pred_check_branch
    %18 = sbr.rel (%p16) target = $region17
  $region16: #{gaussian_transformer_llm.10} parent=0 // pred_region
    %vm19 = vcmask 785408
    %20 = vst.msk [vmem:[#allocation2] sm:$0xff] %vm19, 0.0
    %21 = vst.msk [vmem:[#allocation2 + $0x8] sm:$0xff] %vm19, 0.0
  $region17: #{gaussian_transformer_llm.10} parent=0 // pred_fallthru
    _
  %v22 = vld [vmem:[#allocation2] sm:$0xff]
  %v23 = vld [vmem:[#allocation2 + $0x8] sm:$0xff]
  %v24 = vld [vmem:[%s0] sm:$0xf]
  %v25 = vld [vmem:[%s0 + $0x4] sm:$0xf]
  %v26 = vld [vmem:[%s1] sm:$0xf]
  %v27 = vld [vmem:[%s1 + $0x4] sm:$0xf]
  %v28 = vld [vmem:[%s1 + $0x8] sm:$0xf]
  %v29 = vld [vmem:[%s1 + $0xc] sm:$0xf]
  %v32 = vunpack.c.l.b16 %v24
  %v33 = vunpack.c.l.b16 %v25
  %v34 = vpack.c.b16 %v33, %v32
  %v39 = vunpack.c.l.b16 %v26
  %v40 = vunpack.c.l.b16 %v27
  %v41 = vunpack.c.l.b16 %v28
  %v42 = vunpack.c.l.b16 %v29
  %v43 = vpack.c.b16 %v40, %v39
  %v44 = vpack.c.b16 %v42, %v41
  %vm47 = vcmask 261120
  %v49 = vsel %vm47, %v34, 0
  %51 = vmatprep.subr.bf16.mxu0 0
  %52 = vmatpush1.bf16.msra.mxu0 0
  %53 = vmatprep.subr.bf16.mxu0 0
  %54 = vmatpush1.bf16.msra.mxu0 0
  %55 = vmatprep.subr.bf16.mxu0 0
  %56 = vmatpush1.bf16.msra.mxu0 0
  %57 = vmatprep.subr.bf16.mxu0 0
  %58 = vmatpush1.bf16.msra.mxu0 0
  %59 = vmatprep.subr.bf16.mxu0 0
  %60 = vmatpush1.bf16.msra.mxu0 0
  %61 = vmatprep.subr.bf16.mxu0 0
  %62 = vmatpush1.bf16.msra.mxu0 0
  %63 = vmatprep.subr.bf16.mxu0 0
  %64 = vmatpush1.bf16.msra.mxu0 %v44
  %65 = vmatprep.subr.bf16.mxu0 0
  %66 = vmatpush1.bf16.msra.mxu0 %v43
  %67 = vmatprep.subr.bf16.mxu0 0
  %68 = vmatpush2.bf16.msra.mxu0 0
  %69 = vmatprep.subr.bf16.mxu0 0
  %70 = vmatpush2.bf16.msra.mxu0 0
  %71 = vmatprep.subr.bf16.mxu0 0
  %72 = vmatpush2.bf16.msra.mxu0 0
  %73 = vmatprep.subr.bf16.mxu0 0
  %74 = vmatpush2.bf16.msra.mxu0 0
  %75 = vmatprep.subr.bf16.mxu0 0
  %76 = vmatpush2.bf16.msra.mxu0 0
  %77 = vmatprep.subr.bf16.mxu0 0
  %78 = vmatpush2.bf16.msra.mxu0 0
  %79 = vmatprep.subr.bf16.mxu0 0
  %80 = vmatpush2.bf16.msra.mxu0 0
  %81 = vmatprep.subr.bf16.mxu0 0
  %82 = vmatpush2.bf16.msra.mxu0 0
  %83 = vmatprep.mubr.bf16.mxu0 0
  %84 = vmatmul.mubr.bf16.gmra.mxu0 %v49
  %v85 = vpop.f32.mrf.mxu0
  %v86 = vadd.f32 0.0, %v85
  %v87 = vpop.f32.mrf.mxu0
  %v88 = vpop.f32.mrf.mxu0
  %v89 = vadd.f32 0.0, %v88
  %v90 = vpop.f32.mrf.mxu0
  %91 = vdwg.mxu0
  %v92 = vadd.f32 %v22, %v86
  %v93 = vadd.f32 %v23, %v89
  %vm94 = vcmask 785408
  %95 = vst.msk [vmem:[#allocation2] sm:$0xff] %vm94, %v92
  %96 = vst.msk [vmem:[#allocation2 + $0x8] sm:$0xff] %vm94, %v93
  // Predicated region
  $region18: #{gaussian_transformer_llm.10} parent=0 // pred_check
    %p97 = pneg %p15
  $region19: #{gaussian_transformer_llm.10} parent=0 // pred_check_branch
    %99 = sbr.rel (%p97) target = $region21
  $region20: #{gaussian_transformer_llm.10} parent=0 // pred_region
    %v100 = vld [vmem:[#allocation2] sm:$0xff]
    %v101 = vld [vmem:[#allocation2 + $0x8] sm:$0xff]
    %v102 = vld [vmem:[%s2] sm:$0x1]
    %v104 = vlaneseq
    %v105 = vshrl.u32 %v104, 7
    %v106 = vsub.s32 0, %v105
    %v107 = vrot.slane %v102, %v106
    %v109 = vadd.f32 %v100, %v107
    %v110 = vadd.f32 %v101, %v107
    %v111 = vpack.c.bf16 %v110, %v109
    %v113 = vunpack.c.l.b16 %v111
    %v114 = vunpack.c.h.b16 %v111
    %v115 = vpack.c.b16 %v113, %v113
    %v116 = vpack.c.b16 %v114, %v114
    %vm119 = vcmask 781312
    %120 = vst.msk [vmem:[%s3] sm:$0xf] %vm119, %v115
    %121 = vst.msk [vmem:[%s3 + $0x4] sm:$0xf] %vm119, %v116
  $region21: #{gaussian_transformer_llm.10} parent=0 // pred_fallthru
    _
  // Predicated region
  $region22: #{gaussian_transformer_llm.10} parent=0 // pred_check
    _
  $region23: #{gaussian_transformer_llm.10} parent=0 // pred_check_branch
    %123 = sbr.rel (0) target = $region25
  $region24: #{gaussian_transformer_llm.10} parent=0 // pred_region
    _
  $region25: #{gaussian_transformer_llm.10} parent=0 // pred_fallthru
    _
  // Predicated region
  $region26: #{gaussian_transformer_llm.10} parent=0 // pred_check
    _
  $region27: #{gaussian_transformer_llm.10} parent=0 // pred_check_branch
    %125 = sbr.rel (0) target = $region29
  $region28: #{gaussian_transformer_llm.10} parent=0 // pred_region
    _
  $region29: #{gaussian_transformer_llm.10} parent=0 // pred_fallthru
    _

// kernel: gaussian_transformer_llm.13
$region0: #{gaussian_transformer_llm.13}
  #allocation0 [shape = 'u32[]', space=smem, size = 0x4, offset = 0x4, fixed_abs, tag = 'smem constant byte address 0x4 - core index']
  #allocation1 [shape = 'u32[144,128]{1,0:T(1,128)}', space=vmem, size = 0x12000, scoped, tag = 'internal scratch']
  #allocation2 [shape = 'f32[16,32]{1,0:T(8,128)}', space=vmem, size = 0x2000, scoped, tag = 'scratch operand']
  %s0 = inlined_call_operand.vmem [shape: bf16[16,32], index: 0, kind: input, shape index: {}]
  %s1 = inlined_call_operand.vmem [shape: bf16[32,64], index: 1, kind: input, shape index: {}]
  %s2 = inlined_call_operand.vmem [shape: f32[1,64], index: 2, kind: input, shape index: {}]
  %s3 = inlined_call_operand.vmem [shape: bf16[64,32], index: 3, kind: input, shape index: {}]
  %s4 = inlined_call_operand.vmem [shape: f32[1,32], index: 4, kind: input, shape index: {}]
  %s5 = inlined_call_operand.vmem [shape: f32[1,32], index: 5, kind: input, shape index: {}]
  %s6 = inlined_call_operand.vmem [shape: f32[1,32], index: 6, kind: input, shape index: {}]
  %s7 = inlined_call_operand.vmem [shape: bf16[16,32], index: 7, kind: output, shape index: {}]
  %s8 = sld [smem:[#allocation0]]
  $region38: #{gaussian_transformer_llm.13} parent=0
    _
  %s10 = ssub.s32 1, %s8
  %s11 = scalar_select 0, %s10, %s8
  // Predicated region
  $region2: #{gaussian_transformer_llm.13} parent=0 // pred_check
    _
  $region3: #{gaussian_transformer_llm.13} parent=0 // pred_check_branch
    %13 = sbr.rel (0) target = $region5
  $region4: #{gaussian_transformer_llm.13} parent=0 // pred_region
    _
  $region5: #{gaussian_transformer_llm.13} parent=0 // pred_fallthru
    _
  // Predicated region
  $region6: #{gaussian_transformer_llm.13} parent=0 // pred_check
    _
  $region7: #{gaussian_transformer_llm.13} parent=0 // pred_check_branch
    %15 = sbr.rel (0) target = $region9
  $region8: #{gaussian_transformer_llm.13} parent=0 // pred_region
    _
  $region9: #{gaussian_transformer_llm.13} parent=0 // pred_fallthru
    _
  // Predicated region
  $region10: #{gaussian_transformer_llm.13} parent=0 // pred_check
    _
  $region11: #{gaussian_transformer_llm.13} parent=0 // pred_check_branch
    %17 = sbr.rel (0) target = $region13
  $region12: #{gaussian_transformer_llm.13} parent=0 // pred_region
    _
  $region13: #{gaussian_transformer_llm.13} parent=0 // pred_fallthru
    _
  // Predicated region
  $region14: #{gaussian_transformer_llm.13} parent=0 // pred_check
    _
  $region15: #{gaussian_transformer_llm.13} parent=0 // pred_check_branch
    %19 = sbr.rel (0) target = $region17
  $region16: #{gaussian_transformer_llm.13} parent=0 // pred_region
    _
  $region17: #{gaussian_transformer_llm.13} parent=0 // pred_fallthru
    _
  // Predicated region
  $region18: #{gaussian_transformer_llm.13} parent=0 // pred_check
    _
  $region19: #{gaussian_transformer_llm.13} parent=0 // pred_check_branch
    %21 = sbr.rel (0) target = $region21
  $region20: #{gaussian_transformer_llm.13} parent=0 // pred_region
    _
  $region21: #{gaussian_transformer_llm.13} parent=0 // pred_fallthru
    _
  // Predicated region
  $region22: #{gaussian_transformer_llm.13} parent=0 // pred_check
    _
  $region23: #{gaussian_transformer_llm.13} parent=0 // pred_check_branch
    %23 = sbr.rel (0) target = $region25
  $region24: #{gaussian_transformer_llm.13} parent=0 // pred_region
    _
  $region25: #{gaussian_transformer_llm.13} parent=0 // pred_fallthru
    _
  // Predicated region
  $region26: #{gaussian_transformer_llm.13} parent=0 // pred_check
    _
  $region27: #{gaussian_transformer_llm.13} parent=0 // pred_check_branch
    %25 = sbr.rel (0) target = $region29
  $region28: #{gaussian_transformer_llm.13} parent=0 // pred_region
    _
  $region29: #{gaussian_transformer_llm.13} parent=0 // pred_fallthru
    _
  %v27 = vld [vmem:[%s0] sm:$0xf]
  %v28 = vld [vmem:[%s0 + $0x4] sm:$0xf]
  %v29 = vunpack.c.l.bf16 %v27
  %v30 = vunpack.c.l.bf16 %v28
  %v31 = vld [vmem:[%s4] sm:$0x1]
  %v33 = vlaneseq
  %v34 = vshrl.u32 %v33, 7
  %v35 = vsub.s32 0, %v34
  %v36 = vrot.slane %v31, %v35
  %v38 = vadd.f32 %v29, %v36
  %v39 = vadd.f32 %v30, %v36
  %vm40 = vcmask 261120
  %41 = vst.msk [vmem:[#allocation2] sm:$0xff] %vm40, %v38
  %42 = vst.msk [vmem:[#allocation2 + $0x8] sm:$0xff] %vm40, %v39
  %v43 = vld [vmem:[%s1] sm:$0xf]
  %v44 = vld [vmem:[%s1 + $0x4] sm:$0xf]
  %v45 = vld [vmem:[%s1 + $0x8] sm:$0xf]
  %v46 = vld [vmem:[%s1 + $0xc] sm:$0xf]
  %v47 = vld [vmem:[%s2] sm:$0x1]
  %v49 = vlaneseq
  %v50 = vshrl.u32 %v49, 7
  %v51 = vsub.s32 0, %v50
  %v52 = vrot.slane %v47, %v51
  %v56 = vunpack.c.l.b16 %v27
  %v57 = vunpack.c.l.b16 %v28
  %v58 = vpack.c.b16 %v57, %v56
  %v63 = vunpack.c.l.b16 %v43
  %v64 = vunpack.c.l.b16 %v44
  %v65 = vunpack.c.l.b16 %v45
  %v66 = vunpack.c.l.b16 %v46
  %v67 = vpack.c.b16 %v64, %v63
  %v68 = vpack.c.b16 %v66, %v65
  %v72 = vsel %vm40, %v58, 0
  %74 = vmatprep.subr.bf16.mxu0 0
  %75 = vmatpush1.bf16.msra.mxu0 0
  %76 = vmatprep.subr.bf16.mxu0 0
  %77 = vmatpush1.bf16.msra.mxu0 0
  %78 = vmatprep.subr.bf16.mxu0 0
  %79 = vmatpush1.bf16.msra.mxu0 0
  %80 = vmatprep.subr.bf16.mxu0 0
  %81 = vmatpush1.bf16.msra.mxu0 0
  %82 = vmatprep.subr.bf16.mxu0 0
  %83 = vmatpush1.bf16.msra.mxu0 0
  %84 = vmatprep.subr.bf16.mxu0 0
  %85 = vmatpush1.bf16.msra.mxu0 0
  %86 = vmatprep.subr.bf16.mxu0 0
  %87 = vmatpush1.bf16.msra.mxu0 %v68
  %88 = vmatprep.subr.bf16.mxu0 0
  %89 = vmatpush1.bf16.msra.mxu0 %v67
  %90 = vmatprep.subr.bf16.mxu0 0
  %91 = vmatpush2.bf16.msra.mxu0 0
  %92 = vmatprep.subr.bf16.mxu0 0
  %93 = vmatpush2.bf16.msra.mxu0 0
  %94 = vmatprep.subr.bf16.mxu0 0
  %95 = vmatpush2.bf16.msra.mxu0 0
  %96 = vmatprep.subr.bf16.mxu0 0
  %97 = vmatpush2.bf16.msra.mxu0 0
  %98 = vmatprep.subr.bf16.mxu0 0
  %99 = vmatpush2.bf16.msra.mxu0 0
  %100 = vmatprep.subr.bf16.mxu0 0
  %101 = vmatpush2.bf16.msra.mxu0 0
  %102 = vmatprep.subr.bf16.mxu0 0
  %103 = vmatpush2.bf16.msra.mxu0 0
  %104 = vmatprep.subr.bf16.mxu0 0
  %105 = vmatpush2.bf16.msra.mxu0 0
  %106 = vmatprep.mubr.bf16.mxu0 0
  %107 = vmatmul.mubr.bf16.gmra.mxu0 %v72
  %v108 = vpop.f32.mrf.mxu0
  %v109 = vadd.f32 %v52, %v108
  %v110 = vpop.f32.mrf.mxu0
  %v111 = vpop.f32.mrf.mxu0
  %v112 = vadd.f32 %v52, %v111
  %v113 = vpop.f32.mrf.mxu0
  %114 = vdwg.mxu0
  %v115 = vmax.f32 %v109, 0.0
  %v116 = vmax.f32 %v112, 0.0
  %v117 = vpack.c.bf16 %v116, %v115
  %v118 = vld [vmem:[#allocation2] sm:$0xff]
  %v119 = vld [vmem:[#allocation2 + $0x8] sm:$0xff]
  %v120 = vld [vmem:[%s3] sm:$0xf]
  %v121 = vld [vmem:[%s3 + $0x4] sm:$0xf]
  %v122 = vld [vmem:[%s3 + $0x8] sm:$0xf]
  %v123 = vld [vmem:[%s3 + $0xc] sm:$0xf]
  %v124 = vld [vmem:[%s3 + $0x10] sm:$0xf]
  %v125 = vld [vmem:[%s3 + $0x14] sm:$0xf]
  %v126 = vld [vmem:[%s3 + $0x18] sm:$0xf]
  %v127 = vld [vmem:[%s3 + $0x1c] sm:$0xf]
  %v136 = vunpack.c.l.b16 %v120
  %v137 = vunpack.c.l.b16 %v121
  %v138 = vunpack.c.l.b16 %v122
  %v139 = vunpack.c.l.b16 %v123
  %v140 = vunpack.c.l.b16 %v124
  %v141 = vunpack.c.l.b16 %v125
  %v142 = vunpack.c.l.b16 %v126
  %v143 = vunpack.c.l.b16 %v127
  %v144 = vpack.c.b16 %v137, %v136
  %v145 = vpack.c.b16 %v139, %v138
  %v146 = vpack.c.b16 %v141, %v140
  %v147 = vpack.c.b16 %v143, %v142
  %vm152 = vcmask 523264
  %v154 = vsel %vm152, %v117, 0
  %156 = vmatprep.subr.bf16.mxu0 0
  %157 = vmatpush1.bf16.msra.mxu0 0
  %158 = vmatprep.subr.bf16.mxu0 0
  %159 = vmatpush1.bf16.msra.mxu0 0
  %160 = vmatprep.subr.bf16.mxu0 0
  %161 = vmatpush1.bf16.msra.mxu0 0
  %162 = vmatprep.subr.bf16.mxu0 0
  %163 = vmatpush1.bf16.msra.mxu0 0
  %164 = vmatprep.subr.bf16.mxu0 0
  %165 = vmatpush1.bf16.msra.mxu0 %v147
  %166 = vmatprep.subr.bf16.mxu0 0
  %167 = vmatpush1.bf16.msra.mxu0 %v146
  %168 = vmatprep.subr.bf16.mxu0 0
  %169 = vmatpush1.bf16.msra.mxu0 %v145
  %170 = vmatprep.subr.bf16.mxu0 0
  %171 = vmatpush1.bf16.msra.mxu0 %v144
  %172 = vmatprep.subr.bf16.mxu0 0
  %173 = vmatpush2.bf16.msra.mxu0 0
  %174 = vmatprep.subr.bf16.mxu0 0
  %175 = vmatpush2.bf16.msra.mxu0 0
  %176 = vmatprep.subr.bf16.mxu0 0
  %177 = vmatpush2.bf16.msra.mxu0 0
  %178 = vmatprep.subr.bf16.mxu0 0
  %179 = vmatpush2.bf16.msra.mxu0 0
  %180 = vmatprep.subr.bf16.mxu0 0
  %181 = vmatpush2.bf16.msra.mxu0 0
  %182 = vmatprep.subr.bf16.mxu0 0
  %183 = vmatpush2.bf16.msra.mxu0 0
  %184 = vmatprep.subr.bf16.mxu0 0
  %185 = vmatpush2.bf16.msra.mxu0 0
  %186 = vmatprep.subr.bf16.mxu0 0
  %187 = vmatpush2.bf16.msra.mxu0 0
  %188 = vmatprep.mubr.bf16.mxu0 0
  %189 = vmatmul.mubr.bf16.gmra.mxu0 %v154
  %v190 = vpop.f32.mrf.mxu0
  %v191 = vadd.f32 0.0, %v190
  %v192 = vpop.f32.mrf.mxu0
  %v193 = vpop.f32.mrf.mxu0
  %v194 = vadd.f32 0.0, %v193
  %v195 = vpop.f32.mrf.mxu0
  %196 = vdwg.mxu0
  %v197 = vadd.f32 %v118, %v191
  %v198 = vadd.f32 %v119, %v194
  %199 = vst.msk [vmem:[#allocation2] sm:$0xff] %vm40, %v197
  %200 = vst.msk [vmem:[#allocation2 + $0x8] sm:$0xff] %vm40, %v198
  %v201 = vld [vmem:[#allocation2] sm:$0xff]
  %v202 = vld [vmem:[#allocation2 + $0x8] sm:$0xff]
  %v203 = vsel %vm40, %v201, 0.0
  %204 = vadd.xlane.f32.xlu0 %v203
  %v205 = vpop.xlane.xlu0 %204
  %v206 = vsel %vm40, %v202, 0.0
  %207 = vadd.xlane.f32.xlu0 %v206
  %v208 = vpop.xlane.xlu0 %207
  %v209 = vrcp.pop 32.0
  %v210 = vmul.f32 %v205, %v209
  %v211 = vmul.f32 %v208, %v209
  %v212 = vsub.f32 %v201, %v210
  %v213 = vsub.f32 %v202, %v211
  %v214 = vmul.f32 %v212, %v212
  %v215 = vmul.f32 %v213, %v213
  %v216 = vsel %vm40, %v214, 0.0
  %217 = vadd.xlane.f32.xlu0 %v216
  %v218 = vpop.xlane.xlu0 %217
  %v219 = vsel %vm40, %v215, 0.0
  %220 = vadd.xlane.f32.xlu0 %v219
  %v221 = vpop.xlane.xlu0 %220
  %v222 = vmul.f32 %v218, %v209
  %v223 = vmul.f32 %v221, %v209
  %v224 = vadd.f32 %v222, 1e-05
  %v225 = vadd.f32 %v223, 1e-05
  %v226 = vrsqrt.pop %v224
  %v227 = vrsqrt.pop %v225
  %v228 = vmul.f32 %v212, %v226
  %v229 = vmul.f32 %v213, %v227
  %v230 = vld [vmem:[%s5] sm:$0x1]
  %v232 = vlaneseq
  %v233 = vshrl.u32 %v232, 7
  %v234 = vsub.s32 0, %v233
  %v235 = vrot.slane %v230, %v234
  %v237 = vmul.f32 %v228, %v235
  %v238 = vmul.f32 %v229, %v235
  %v239 = vld [vmem:[%s6] sm:$0x1]
  %v241 = vlaneseq
  %v242 = vshrl.u32 %v241, 7
  %v243 = vsub.s32 0, %v242
  %v244 = vrot.slane %v239, %v243
  %v246 = vadd.f32 %v237, %v244
  %v247 = vadd.f32 %v238, %v244
  %v248 = vpack.c.bf16 %v247, %v246
  %v250 = vunpack.c.l.b16 %v248
  %v251 = vunpack.c.h.b16 %v248
  %v252 = vpack.c.b16 %v250, %v250
  %v253 = vpack.c.b16 %v251, %v251
  %vm256 = vcmask 257024
  %257 = vst.msk [vmem:[%s7] sm:$0xf] %vm256, %v252
  %258 = vst.msk [vmem:[%s7 + $0x4] sm:$0xf] %vm256, %v253
  // Predicated region
  $region30: #{gaussian_transformer_llm.13} parent=0 // pred_check
    _
  $region31: #{gaussian_transformer_llm.13} parent=0 // pred_check_branch
    %260 = sbr.rel (0) target = $region33
  $region32: #{gaussian_transformer_llm.13} parent=0 // pred_region
    _
  $region33: #{gaussian_transformer_llm.13} parent=0 // pred_fallthru
    _
  // Predicated region
  $region34: #{gaussian_transformer_llm.13} parent=0 // pred_check
    _
  $region35: #{gaussian_transformer_llm.13} parent=0 // pred_check_branch
    %262 = sbr.rel (0) target = $region37
  $region36: #{gaussian_transformer_llm.13} parent=0 // pred_region
    _
  $region37: #{gaussian_transformer_llm.13} parent=0 // pred_fallthru
    _

// kernel: gaussian_transformer_llm.11
$region0: #{gaussian_transformer_llm.11}
  #allocation0 [shape = 'u32[]', space=smem, size = 0x4, offset = 0x4, fixed_abs, tag = 'smem constant byte address 0x4 - core index']
  #allocation1 [shape = 'u32[144,128]{1,0:T(1,128)}', space=vmem, size = 0x12000, scoped, tag = 'internal scratch']
  %s0 = inlined_call_operand.vmem [shape: bf16[2,8,96], index: 0, kind: input, shape index: {}]
  %s1 = inlined_call_operand.vmem [shape: bf16[2,8,32], index: 1, kind: output, shape index: {}]
  %s2 = sld [smem:[#allocation0]]
  $region14: #{gaussian_transformer_llm.11} parent=0
    _
  %s4 = ssub.s32 1, %s2
  %s5 = scalar_select 0, %s4, %s2
  // Predicated region
  $region2: #{gaussian_transformer_llm.11} parent=0 // pred_check
    _
  $region3: #{gaussian_transformer_llm.11} parent=0 // pred_check_branch
    %7 = sbr.rel (0) target = $region5
  $region4: #{gaussian_transformer_llm.11} parent=0 // pred_region
    _
  $region5: #{gaussian_transformer_llm.11} parent=0 // pred_fallthru
    _
  %v10 = vld [vmem:[%s0] sm:$0xf]
  %v11 = vld [vmem:[%s0 + $0x4] sm:$0xf]
  %v12 = vmul.bf16 %v10, 1052065461
  %v13 = vmul.bf16 %v11, 1052065461
  %v15 = vunpack.c.l.b16 %v10
  %v16 = vpack.c.b16 %v15, %v15
  %17 = vrot.lane.b32.xlu0 %v16, 96
  %v18 = vpop.permute.xlu0 %17
  %vm19 = vcmask 64512
  %v21 = vsel %vm19, %v12, 0
  %v24 = vsel %vm19, %v18, 0
  %26 = vmatprep.subr.bf16.mxu0 0
  %27 = vmatpush1.bf16.xpose.msra.mxu0 0
  %28 = vmatprep.subr.bf16.mxu0 0
  %29 = vmatpush1.bf16.xpose.msra.mxu0 0
  %30 = vmatprep.subr.bf16.mxu0 0
  %31 = vmatpush1.bf16.xpose.msra.mxu0 0
  %32 = vmatprep.subr.bf16.mxu0 0
  %33 = vmatpush1.bf16.xpose.msra.mxu0 0
  %34 = vmatprep.subr.bf16.mxu0 0
  %35 = vmatpush1.bf16.xpose.msra.mxu0 0
  %36 = vmatprep.subr.bf16.mxu0 0
  %37 = vmatpush1.bf16.xpose.msra.mxu0 0
  %38 = vmatprep.subr.bf16.mxu0 0
  %39 = vmatpush1.bf16.xpose.msra.mxu0 0
  %40 = vmatprep.subr.bf16.mxu0 0
  %41 = vmatpush1.bf16.xpose.msra.mxu0 %v24
  %42 = vmatprep.subr.bf16.mxu0 0
  %43 = vmatpush2.bf16.xpose.msra.mxu0 0
  %44 = vmatprep.subr.bf16.mxu0 0
  %45 = vmatpush2.bf16.xpose.msra.mxu0 0
  %46 = vmatprep.subr.bf16.mxu0 0
  %47 = vmatpush2.bf16.xpose.msra.mxu0 0
  %48 = vmatprep.subr.bf16.mxu0 0
  %49 = vmatpush2.bf16.xpose.msra.mxu0 0
  %50 = vmatprep.subr.bf16.mxu0 0
  %51 = vmatpush2.bf16.xpose.msra.mxu0 0
  %52 = vmatprep.subr.bf16.mxu0 0
  %53 = vmatpush2.bf16.xpose.msra.mxu0 0
  %54 = vmatprep.subr.bf16.mxu0 0
  %55 = vmatpush2.bf16.xpose.msra.mxu0 0
  %56 = vmatprep.subr.bf16.mxu0 0
  %57 = vmatpush2.bf16.xpose.msra.mxu0 0
  %58 = vmatprep.mubr.bf16.mxu0 0
  %59 = vmatmul.mubr.bf16.gmra.mxu0 %v21
  %v60 = vpop.f32.mrf.mxu0
  %v61 = vadd.f32 0.0, %v60
  %v62 = vpop.f32.mrf.mxu0
  %v63 = vpop.f32.mrf.mxu0
  %v64 = vpop.f32.mrf.mxu0
  %65 = vdwg.mxu0
  %v67 = vunpack.c.l.b16 %v11
  %v68 = vpack.c.b16 %v67, %v67
  %69 = vrot.lane.b32.xlu0 %v68, 96
  %v70 = vpop.permute.xlu0 %69
  %v72 = vsel %vm19, %v13, 0
  %v75 = vsel %vm19, %v70, 0
  %77 = vmatprep.subr.bf16.mxu0 0
  %78 = vmatpush1.bf16.xpose.msra.mxu0 0
  %79 = vmatprep.subr.bf16.mxu0 0
  %80 = vmatpush1.bf16.xpose.msra.mxu0 0
  %81 = vmatprep.subr.bf16.mxu0 0
  %82 = vmatpush1.bf16.xpose.msra.mxu0 0
  %83 = vmatprep.subr.bf16.mxu0 0
  %84 = vmatpush1.bf16.xpose.msra.mxu0 0
  %85 = vmatprep.subr.bf16.mxu0 0
  %86 = vmatpush1.bf16.xpose.msra.mxu0 0
  %87 = vmatprep.subr.bf16.mxu0 0
  %88 = vmatpush1.bf16.xpose.msra.mxu0 0
  %89 = vmatprep.subr.bf16.mxu0 0
  %90 = vmatpush1.bf16.xpose.msra.mxu0 0
  %91 = vmatprep.subr.bf16.mxu0 0
  %92 = vmatpush1.bf16.xpose.msra.mxu0 %v75
  %93 = vmatprep.subr.bf16.mxu0 0
  %94 = vmatpush2.bf16.xpose.msra.mxu0 0
  %95 = vmatprep.subr.bf16.mxu0 0
  %96 = vmatpush2.bf16.xpose.msra.mxu0 0
  %97 = vmatprep.subr.bf16.mxu0 0
  %98 = vmatpush2.bf16.xpose.msra.mxu0 0
  %99 = vmatprep.subr.bf16.mxu0 0
  %100 = vmatpush2.bf16.xpose.msra.mxu0 0
  %101 = vmatprep.subr.bf16.mxu0 0
  %102 = vmatpush2.bf16.xpose.msra.mxu0 0
  %103 = vmatprep.subr.bf16.mxu0 0
  %104 = vmatpush2.bf16.xpose.msra.mxu0 0
  %105 = vmatprep.subr.bf16.mxu0 0
  %106 = vmatpush2.bf16.xpose.msra.mxu0 0
  %107 = vmatprep.subr.bf16.mxu0 0
  %108 = vmatpush2.bf16.xpose.msra.mxu0 0
  %109 = vmatprep.mubr.bf16.mxu0 0
  %110 = vmatmul.mubr.bf16.gmra.mxu0 %v72
  %v111 = vpop.f32.mrf.mxu0
  %v112 = vadd.f32 0.0, %v111
  %v113 = vpop.f32.mrf.mxu0
  %v114 = vpop.f32.mrf.mxu0
  %v115 = vpop.f32.mrf.mxu0
  %116 = vdwg.mxu0
  %v117 = vsel %vm19, %v61, -inf
  %118 = vmax.xlane.f32.xlu0 %v117
  %v119 = vpop.xlane.xlu0 %118
  %v120 = vsel %vm19, %v112, -inf
  %121 = vmax.xlane.f32.xlu0 %v120
  %v122 = vpop.xlane.xlu0 %121
  %v123 = vsub.f32 %v61, %v119
  %v124 = vsub.f32 %v112, %v122
  %v125 = vmul.f32 %v123, 1.442695
  %v126 = vpow.pop %v125
  %v127 = vmul.f32 %v124, 1.442695
  %v128 = vpow.pop %v127
  %v129 = vsel %vm19, %v126, 0.0
  %130 = vadd.xlane.f32.xlu0 %v129
  %v131 = vpop.xlane.xlu0 %130
  %v132 = vsel %vm19, %v128, 0.0
  %133 = vadd.xlane.f32.xlu0 %v132
  %v134 = vpop.xlane.xlu0 %133
  %v135 = vrcp.pop %v131
  %v136 = vrcp.pop %v134
  %v137 = vmul.f32 %v126, %v135
  %v138 = vmul.f32 %v128, %v136
  %v139 = vpack.c.bf16 %v137, %v137
  %v140 = vpack.c.bf16 %v138, %v138
  %141 = vrot.lane.b32.xlu0 %v16, 64
  %v142 = vpop.permute.xlu0 %141
  %v144 = vsel %vm19, %v139, 0
  %vm146 = vcmask 1043456
  %v148 = vsel %vm146, %v142, 0
  %150 = vmatprep.subr.bf16.mxu0 0
  %151 = vmatpush1.bf16.msra.mxu0 0
  %152 = vmatprep.subr.bf16.mxu0 0
  %153 = vmatpush1.bf16.msra.mxu0 0
  %154 = vmatprep.subr.bf16.mxu0 0
  %155 = vmatpush1.bf16.msra.mxu0 0
  %156 = vmatprep.subr.bf16.mxu0 0
  %157 = vmatpush1.bf16.msra.mxu0 0
  %158 = vmatprep.subr.bf16.mxu0 0
  %159 = vmatpush1.bf16.msra.mxu0 0
  %160 = vmatprep.subr.bf16.mxu0 0
  %161 = vmatpush1.bf16.msra.mxu0 0
  %162 = vmatprep.subr.bf16.mxu0 0
  %163 = vmatpush1.bf16.msra.mxu0 0
  %164 = vmatprep.subr.bf16.mxu0 0
  %165 = vmatpush1.bf16.msra.mxu0 %v148
  %166 = vmatprep.subr.bf16.mxu0 0
  %167 = vmatpush2.bf16.msra.mxu0 0
  %168 = vmatprep.subr.bf16.mxu0 0
  %169 = vmatpush2.bf16.msra.mxu0 0
  %170 = vmatprep.subr.bf16.mxu0 0
  %171 = vmatpush2.bf16.msra.mxu0 0
  %172 = vmatprep.subr.bf16.mxu0 0
  %173 = vmatpush2.bf16.msra.mxu0 0
  %174 = vmatprep.subr.bf16.mxu0 0
  %175 = vmatpush2.bf16.msra.mxu0 0
  %176 = vmatprep.subr.bf16.mxu0 0
  %177 = vmatpush2.bf16.msra.mxu0 0
  %178 = vmatprep.subr.bf16.mxu0 0
  %179 = vmatpush2.bf16.msra.mxu0 0
  %180 = vmatprep.subr.bf16.mxu0 0
  %181 = vmatpush2.bf16.msra.mxu0 0
  %182 = vmatprep.mubr.bf16.mxu0 0
  %183 = vmatmul.mubr.bf16.gmra.mxu0 %v144
  %v184 = vpop.f32.mrf.mxu0
  %v185 = vadd.f32 0.0, %v184
  %v186 = vpop.f32.mrf.mxu0
  %v187 = vpop.f32.mrf.mxu0
  %v188 = vpop.f32.mrf.mxu0
  %189 = vdwg.mxu0
  %190 = vrot.lane.b32.xlu0 %v68, 64
  %v191 = vpop.permute.xlu0 %190
  %v193 = vsel %vm19, %v140, 0
  %v196 = vsel %vm146, %v191, 0
  %198 = vmatprep.subr.bf16.mxu0 0
  %199 = vmatpush1.bf16.msra.mxu0 0
  %200 = vmatprep.subr.bf16.mxu0 0
  %201 = vmatpush1.bf16.msra.mxu0 0
  %202 = vmatprep.subr.bf16.mxu0 0
  %203 = vmatpush1.bf16.msra.mxu0 0
  %204 = vmatprep.subr.bf16.mxu0 0
  %205 = vmatpush1.bf16.msra.mxu0 0
  %206 = vmatprep.subr.bf16.mxu0 0
  %207 = vmatpush1.bf16.msra.mxu0 0
  %208 = vmatprep.subr.bf16.mxu0 0
  %209 = vmatpush1.bf16.msra.mxu0 0
  %210 = vmatprep.subr.bf16.mxu0 0
  %211 = vmatpush1.bf16.msra.mxu0 0
  %212 = vmatprep.subr.bf16.mxu0 0
  %213 = vmatpush1.bf16.msra.mxu0 %v196
  %214 = vmatprep.subr.bf16.mxu0 0
  %215 = vmatpush2.bf16.msra.mxu0 0
  %216 = vmatprep.subr.bf16.mxu0 0
  %217 = vmatpush2.bf16.msra.mxu0 0
  %218 = vmatprep.subr.bf16.mxu0 0
  %219 = vmatpush2.bf16.msra.mxu0 0
  %220 = vmatprep.subr.bf16.mxu0 0
  %221 = vmatpush2.bf16.msra.mxu0 0
  %222 = vmatprep.subr.bf16.mxu0 0
  %223 = vmatpush2.bf16.msra.mxu0 0
  %224 = vmatprep.subr.bf16.mxu0 0
  %225 = vmatpush2.bf16.msra.mxu0 0
  %226 = vmatprep.subr.bf16.mxu0 0
  %227 = vmatpush2.bf16.msra.mxu0 0
  %228 = vmatprep.subr.bf16.mxu0 0
  %229 = vmatpush2.bf16.msra.mxu0 0
  %230 = vmatprep.mubr.bf16.mxu0 0
  %231 = vmatmul.mubr.bf16.gmra.mxu0 %v193
  %v232 = vpop.f32.mrf.mxu0
  %v233 = vadd.f32 0.0, %v232
  %v234 = vpop.f32.mrf.mxu0
  %v235 = vpop.f32.mrf.mxu0
  %v236 = vpop.f32.mrf.mxu0
  %237 = vdwg.mxu0
  %v238 = vpack.c.bf16 %v185, %v185
  %v239 = vpack.c.bf16 %v233, %v233
  %vm240 = vcmask 60416
  %241 = vst.msk [vmem:[%s1] sm:$0xf] %vm240, %v238
  %242 = vst.msk [vmem:[%s1 + $0x4] sm:$0xf] %vm240, %v239
  %v243 = vld [vmem:[%s0] sm:$0xf]
  %v244 = vld [vmem:[%s0 + $0x4] sm:$0xf]
  %v245 = vmul.bf16 %v243, 1052065461
  %v246 = vmul.bf16 %v244, 1052065461
  %v248 = vunpack.c.l.b16 %v245
  %v249 = vpack.c.b16 %v248, %v248
  %250 = vrot.lane.b32.xlu0 %v249, 120
  %v251 = vpop.permute.xlu0 %250
  %v253 = vunpack.c.l.b16 %v243
  %v254 = vpack.c.b16 %v253, %v253
  %255 = vrot.lane.b32.xlu0 %v254, 88
  %v256 = vpop.permute.xlu0 %255
  %v258 = vsel %vm19, %v251, 0
  %v261 = vsel %vm19, %v256, 0
  %263 = vmatprep.subr.bf16.mxu0 0
  %264 = vmatpush1.bf16.xpose.msra.mxu0 0
  %265 = vmatprep.subr.bf16.mxu0 0
  %266 = vmatpush1.bf16.xpose.msra.mxu0 0
  %267 = vmatprep.subr.bf16.mxu0 0
  %268 = vmatpush1.bf16.xpose.msra.mxu0 0
  %269 = vmatprep.subr.bf16.mxu0 0
  %270 = vmatpush1.bf16.xpose.msra.mxu0 0
  %271 = vmatprep.subr.bf16.mxu0 0
  %272 = vmatpush1.bf16.xpose.msra.mxu0 0
  %273 = vmatprep.subr.bf16.mxu0 0
  %274 = vmatpush1.bf16.xpose.msra.mxu0 0
  %275 = vmatprep.subr.bf16.mxu0 0
  %276 = vmatpush1.bf16.xpose.msra.mxu0 0
  %277 = vmatprep.subr.bf16.mxu0 0
  %278 = vmatpush1.bf16.xpose.msra.mxu0 %v261
  %279 = vmatprep.subr.bf16.mxu0 0
  %280 = vmatpush2.bf16.xpose.msra.mxu0 0
  %281 = vmatprep.subr.bf16.mxu0 0
  %282 = vmatpush2.bf16.xpose.msra.mxu0 0
  %283 = vmatprep.subr.bf16.mxu0 0
  %284 = vmatpush2.bf16.xpose.msra.mxu0 0
  %285 = vmatprep.subr.bf16.mxu0 0
  %286 = vmatpush2.bf16.xpose.msra.mxu0 0
  %287 = vmatprep.subr.bf16.mxu0 0
  %288 = vmatpush2.bf16.xpose.msra.mxu0 0
  %289 = vmatprep.subr.bf16.mxu0 0
  %290 = vmatpush2.bf16.xpose.msra.mxu0 0
  %291 = vmatprep.subr.bf16.mxu0 0
  %292 = vmatpush2.bf16.xpose.msra.mxu0 0
  %293 = vmatprep.subr.bf16.mxu0 0
  %294 = vmatpush2.bf16.xpose.msra.mxu0 0
  %295 = vmatprep.mubr.bf16.mxu0 0
  %296 = vmatmul.mubr.bf16.gmra.mxu0 %v258
  %v297 = vpop.f32.mrf.mxu0
  %v298 = vadd.f32 0.0, %v297
  %v299 = vpop.f32.mrf.mxu0
  %v300 = vpop.f32.mrf.mxu0
  %v301 = vpop.f32.mrf.mxu0
  %302 = vdwg.mxu0
  %v304 = vunpack.c.l.b16 %v246
  %v305 = vpack.c.b16 %v304, %v304
  %306 = vrot.lane.b32.xlu0 %v305, 120
  %v307 = vpop.permute.xlu0 %306
  %v309 = vunpack.c.l.b16 %v244
  %v310 = vpack.c.b16 %v309, %v309
  %311 = vrot.lane.b32.xlu0 %v310, 88
  %v312 = vpop.permute.xlu0 %311
  %v314 = vsel %vm19, %v307, 0
  %v317 = vsel %vm19, %v312, 0
  %319 = vmatprep.subr.bf16.mxu0 0
  %320 = vmatpush1.bf16.xpose.msra.mxu0 0
  %321 = vmatprep.subr.bf16.mxu0 0
  %322 = vmatpush1.bf16.xpose.msra.mxu0 0
  %323 = vmatprep.subr.bf16.mxu0 0
  %324 = vmatpush1.bf16.xpose.msra.mxu0 0
  %325 = vmatprep.subr.bf16.mxu0 0
  %326 = vmatpush1.bf16.xpose.msra.mxu0 0
  %327 = vmatprep.subr.bf16.mxu0 0
  %328 = vmatpush1.bf16.xpose.msra.mxu0 0
  %329 = vmatprep.subr.bf16.mxu0 0
  %330 = vmatpush1.bf16.xpose.msra.mxu0 0
  %331 = vmatprep.subr.bf16.mxu0 0
  %332 = vmatpush1.bf16.xpose.msra.mxu0 0
  %333 = vmatprep.subr.bf16.mxu0 0
  %334 = vmatpush1.bf16.xpose.msra.mxu0 %v317
  %335 = vmatprep.subr.bf16.mxu0 0
  %336 = vmatpush2.bf16.xpose.msra.mxu0 0
  %337 = vmatprep.subr.bf16.mxu0 0
  %338 = vmatpush2.bf16.xpose.msra.mxu0 0
  %339 = vmatprep.subr.bf16.mxu0 0
  %340 = vmatpush2.bf16.xpose.msra.mxu0 0
  %341 = vmatprep.subr.bf16.mxu0 0
  %342 = vmatpush2.bf16.xpose.msra.mxu0 0
  %343 = vmatprep.subr.bf16.mxu0 0
  %344 = vmatpush2.bf16.xpose.msra.mxu0 0
  %345 = vmatprep.subr.bf16.mxu0 0
  %346 = vmatpush2.bf16.xpose.msra.mxu0 0
  %347 = vmatprep.subr.bf16.mxu0 0
  %348 = vmatpush2.bf16.xpose.msra.mxu0 0
  %349 = vmatprep.subr.bf16.mxu0 0
  %350 = vmatpush2.bf16.xpose.msra.mxu0 0
  %351 = vmatprep.mubr.bf16.mxu0 0
  %352 = vmatmul.mubr.bf16.gmra.mxu0 %v314
  %v353 = vpop.f32.mrf.mxu0
  %v354 = vadd.f32 0.0, %v353
  %v355 = vpop.f32.mrf.mxu0
  %v356 = vpop.f32.mrf.mxu0
  %v357 = vpop.f32.mrf.mxu0
  %358 = vdwg.mxu0
  %v359 = vsel %vm19, %v298, -inf
  %360 = vmax.xlane.f32.xlu0 %v359
  %v361 = vpop.xlane.xlu0 %360
  %v362 = vsel %vm19, %v354, -inf
  %363 = vmax.xlane.f32.xlu0 %v362
  %v364 = vpop.xlane.xlu0 %363
  %v365 = vsub.f32 %v298, %v361
  %v366 = vsub.f32 %v354, %v364
  %v367 = vmul.f32 %v365, 1.442695
  %v368 = vpow.pop %v367
  %v369 = vmul.f32 %v366, 1.442695
  %v370 = vpow.pop %v369
  %v371 = vsel %vm19, %v368, 0.0
  %372 = vadd.xlane.f32.xlu0 %v371
  %v373 = vpop.xlane.xlu0 %372
  %v374 = vsel %vm19, %v370, 0.0
  %375 = vadd.xlane.f32.xlu0 %v374
  %v376 = vpop.xlane.xlu0 %375
  %v377 = vrcp.pop %v373
  %v378 = vrcp.pop %v376
  %v379 = vmul.f32 %v368, %v377
  %v380 = vmul.f32 %v370, %v378
  %v381 = vpack.c.bf16 %v379, %v379
  %v382 = vpack.c.bf16 %v380, %v380
  %383 = vrot.lane.b32.xlu0 %v254, 56
  %v384 = vpop.permute.xlu0 %383
  %v386 = vsel %vm19, %v381, 0
  %v389 = vsel %vm146, %v384, 0
  %391 = vmatprep.subr.bf16.mxu0 0
  %392 = vmatpush1.bf16.msra.mxu0 0
  %393 = vmatprep.subr.bf16.mxu0 0
  %394 = vmatpush1.bf16.msra.mxu0 0
  %395 = vmatprep.subr.bf16.mxu0 0
  %396 = vmatpush1.bf16.msra.mxu0 0
  %397 = vmatprep.subr.bf16.mxu0 0
  %398 = vmatpush1.bf16.msra.mxu0 0
  %399 = vmatprep.subr.bf16.mxu0 0
  %400 = vmatpush1.bf16.msra.mxu0 0
  %401 = vmatprep.subr.bf16.mxu0 0
  %402 = vmatpush1.bf16.msra.mxu0 0
  %403 = vmatprep.subr.bf16.mxu0 0
  %404 = vmatpush1.bf16.msra.mxu0 0
  %405 = vmatprep.subr.bf16.mxu0 0
  %406 = vmatpush1.bf16.msra.mxu0 %v389
  %407 = vmatprep.subr.bf16.mxu0 0
  %408 = vmatpush2.bf16.msra.mxu0 0
  %409 = vmatprep.subr.bf16.mxu0 0
  %410 = vmatpush2.bf16.msra.mxu0 0
  %411 = vmatprep.subr.bf16.mxu0 0
  %412 = vmatpush2.bf16.msra.mxu0 0
  %413 = vmatprep.subr.bf16.mxu0 0
  %414 = vmatpush2.bf16.msra.mxu0 0
  %415 = vmatprep.subr.bf16.mxu0 0
  %416 = vmatpush2.bf16.msra.mxu0 0
  %417 = vmatprep.subr.bf16.mxu0 0
  %418 = vmatpush2.bf16.msra.mxu0 0
  %419 = vmatprep.subr.bf16.mxu0 0
  %420 = vmatpush2.bf16.msra.mxu0 0
  %421 = vmatprep.subr.bf16.mxu0 0
  %422 = vmatpush2.bf16.msra.mxu0 0
  %423 = vmatprep.mubr.bf16.mxu0 0
  %424 = vmatmul.mubr.bf16.gmra.mxu0 %v386
  %v425 = vpop.f32.mrf.mxu0
  %v426 = vadd.f32 0.0, %v425
  %v427 = vpop.f32.mrf.mxu0
  %v428 = vpop.f32.mrf.mxu0
  %v429 = vpop.f32.mrf.mxu0
  %430 = vdwg.mxu0
  %431 = vrot.lane.b32.xlu0 %v310, 56
  %v432 = vpop.permute.xlu0 %431
  %v434 = vsel %vm19, %v382, 0
  %v437 = vsel %vm146, %v432, 0
  %439 = vmatprep.subr.bf16.mxu0 0
  %440 = vmatpush1.bf16.msra.mxu0 0
  %441 = vmatprep.subr.bf16.mxu0 0
  %442 = vmatpush1.bf16.msra.mxu0 0
  %443 = vmatprep.subr.bf16.mxu0 0
  %444 = vmatpush1.bf16.msra.mxu0 0
  %445 = vmatprep.subr.bf16.mxu0 0
  %446 = vmatpush1.bf16.msra.mxu0 0
  %447 = vmatprep.subr.bf16.mxu0 0
  %448 = vmatpush1.bf16.msra.mxu0 0
  %449 = vmatprep.subr.bf16.mxu0 0
  %450 = vmatpush1.bf16.msra.mxu0 0
  %451 = vmatprep.subr.bf16.mxu0 0
  %452 = vmatpush1.bf16.msra.mxu0 0
  %453 = vmatprep.subr.bf16.mxu0 0
  %454 = vmatpush1.bf16.msra.mxu0 %v437
  %455 = vmatprep.subr.bf16.mxu0 0
  %456 = vmatpush2.bf16.msra.mxu0 0
  %457 = vmatprep.subr.bf16.mxu0 0
  %458 = vmatpush2.bf16.msra.mxu0 0
  %459 = vmatprep.subr.bf16.mxu0 0
  %460 = vmatpush2.bf16.msra.mxu0 0
  %461 = vmatprep.subr.bf16.mxu0 0
  %462 = vmatpush2.bf16.msra.mxu0 0
  %463 = vmatprep.subr.bf16.mxu0 0
  %464 = vmatpush2.bf16.msra.mxu0 0
  %465 = vmatprep.subr.bf16.mxu0 0
  %466 = vmatpush2.bf16.msra.mxu0 0
  %467 = vmatprep.subr.bf16.mxu0 0
  %468 = vmatpush2.bf16.msra.mxu0 0
  %469 = vmatprep.subr.bf16.mxu0 0
  %470 = vmatpush2.bf16.msra.mxu0 0
  %471 = vmatprep.mubr.bf16.mxu0 0
  %472 = vmatmul.mubr.bf16.gmra.mxu0 %v434
  %v473 = vpop.f32.mrf.mxu0
  %v474 = vadd.f32 0.0, %v473
  %v475 = vpop.f32.mrf.mxu0
  %v476 = vpop.f32.mrf.mxu0
  %v477 = vpop.f32.mrf.mxu0
  %478 = vdwg.mxu0
  %v479 = vpack.c.bf16 %v426, %v426
  %v480 = vpack.c.bf16 %v474, %v474
  %v483 = vunpack.c.l.b16 %v479
  %v484 = vunpack.c.l.b16 %v480
  %v485 = vpack.c.b16 %v483, %v483
  %v486 = vpack.c.b16 %v484, %v484
  %487 = vrot.lane.b32.xlu0 %v485, 8
  %v488 = vpop.permute.xlu0 %487
  %489 = vrot.lane.b32.xlu0 %v486, 8
  %v490 = vpop.permute.xlu0 %489
  %vm493 = vcmask 126016
  %494 = vst.msk [vmem:[%s1] sm:$0xf] %vm493, %v488
  %495 = vst.msk [vmem:[%s1 + $0x4] sm:$0xf] %vm493, %v490
  %v496 = vld [vmem:[%s0] sm:$0xf]
  %v497 = vld [vmem:[%s0 + $0x4] sm:$0xf]
  %v498 = vmul.bf16 %v496, 1052065461
  %v499 = vmul.bf16 %v497, 1052065461
  %v501 = vunpack.c.l.b16 %v498
  %v502 = vpack.c.b16 %v501, %v501
  %503 = vrot.lane.b32.xlu0 %v502, 112
  %v504 = vpop.permute.xlu0 %503
  %v506 = vunpack.c.l.b16 %v496
  %v507 = vpack.c.b16 %v506, %v506
  %508 = vrot.lane.b32.xlu0 %v507, 80
  %v509 = vpop.permute.xlu0 %508
  %v511 = vsel %vm19, %v504, 0
  %v514 = vsel %vm19, %v509, 0
  %516 = vmatprep.subr.bf16.mxu0 0
  %517 = vmatpush1.bf16.xpose.msra.mxu0 0
  %518 = vmatprep.subr.bf16.mxu0 0
  %519 = vmatpush1.bf16.xpose.msra.mxu0 0
  %520 = vmatprep.subr.bf16.mxu0 0
  %521 = vmatpush1.bf16.xpose.msra.mxu0 0
  %522 = vmatprep.subr.bf16.mxu0 0
  %523 = vmatpush1.bf16.xpose.msra.mxu0 0
  %524 = vmatprep.subr.bf16.mxu0 0
  %525 = vmatpush1.bf16.xpose.msra.mxu0 0
  %526 = vmatprep.subr.bf16.mxu0 0
  %527 = vmatpush1.bf16.xpose.msra.mxu0 0
  %528 = vmatprep.subr.bf16.mxu0 0
  %529 = vmatpush1.bf16.xpose.msra.mxu0 0
  %530 = vmatprep.subr.bf16.mxu0 0
  %531 = vmatpush1.bf16.xpose.msra.mxu0 %v514
  %532 = vmatprep.subr.bf16.mxu0 0
  %533 = vmatpush2.bf16.xpose.msra.mxu0 0
  %534 = vmatprep.subr.bf16.mxu0 0
  %535 = vmatpush2.bf16.xpose.msra.mxu0 0
  %536 = vmatprep.subr.bf16.mxu0 0
  %537 = vmatpush2.bf16.xpose.msra.mxu0 0
  %538 = vmatprep.subr.bf16.mxu0 0
  %539 = vmatpush2.bf16.xpose.msra.mxu0 0
  %540 = vmatprep.subr.bf16.mxu0 0
  %541 = vmatpush2.bf16.xpose.msra.mxu0 0
  %542 = vmatprep.subr.bf16.mxu0 0
  %543 = vmatpush2.bf16.xpose.msra.mxu0 0
  %544 = vmatprep.subr.bf16.mxu0 0
  %545 = vmatpush2.bf16.xpose.msra.mxu0 0
  %546 = vmatprep.subr.bf16.mxu0 0
  %547 = vmatpush2.bf16.xpose.msra.mxu0 0
  %548 = vmatprep.mubr.bf16.mxu0 0
  %549 = vmatmul.mubr.bf16.gmra.mxu0 %v511
  %v550 = vpop.f32.mrf.mxu0
  %v551 = vadd.f32 0.0, %v550
  %v552 = vpop.f32.mrf.mxu0
  %v553 = vpop.f32.mrf.mxu0
  %v554 = vpop.f32.mrf.mxu0
  %555 = vdwg.mxu0
  %v557 = vunpack.c.l.b16 %v499
  %v558 = vpack.c.b16 %v557, %v557
  %559 = vrot.lane.b32.xlu0 %v558, 112
  %v560 = vpop.permute.xlu0 %559
  %v562 = vunpack.c.l.b16 %v497
  %v563 = vpack.c.b16 %v562, %v562
  %564 = vrot.lane.b32.xlu0 %v563, 80
  %v565 = vpop.permute.xlu0 %564
  %v567 = vsel %vm19, %v560, 0
  %v570 = vsel %vm19, %v565, 0
  %572 = vmatprep.subr.bf16.mxu0 0
  %573 = vmatpush1.bf16.xpose.msra.mxu0 0
  %574 = vmatprep.subr.bf16.mxu0 0
  %575 = vmatpush1.bf16.xpose.msra.mxu0 0
  %576 = vmatprep.subr.bf16.mxu0 0
  %577 = vmatpush1.bf16.xpose.msra.mxu0 0
  %578 = vmatprep.subr.bf16.mxu0 0
  %579 = vmatpush1.bf16.xpose.msra.mxu0 0
  %580 = vmatprep.subr.bf16.mxu0 0
  %581 = vmatpush1.bf16.xpose.msra.mxu0 0
  %582 = vmatprep.subr.bf16.mxu0 0
  %583 = vmatpush1.bf16.xpose.msra.mxu0 0
  %584 = vmatprep.subr.bf16.mxu0 0
  %585 = vmatpush1.bf16.xpose.msra.mxu0 0
  %586 = vmatprep.subr.bf16.mxu0 0
  %587 = vmatpush1.bf16.xpose.msra.mxu0 %v570
  %588 = vmatprep.subr.bf16.mxu0 0
  %589 = vmatpush2.bf16.xpose.msra.mxu0 0
  %590 = vmatprep.subr.bf16.mxu0 0
  %591 = vmatpush2.bf16.xpose.msra.mxu0 0
  %592 = vmatprep.subr.bf16.mxu0 0
  %593 = vmatpush2.bf16.xpose.msra.mxu0 0
  %594 = vmatprep.subr.bf16.mxu0 0
  %595 = vmatpush2.bf16.xpose.msra.mxu0 0
  %596 = vmatprep.subr.bf16.mxu0 0
  %597 = vmatpush2.bf16.xpose.msra.mxu0 0
  %598 = vmatprep.subr.bf16.mxu0 0
  %599 = vmatpush2.bf16.xpose.msra.mxu0 0
  %600 = vmatprep.subr.bf16.mxu0 0
  %601 = vmatpush2.bf16.xpose.msra.mxu0 0
  %602 = vmatprep.subr.bf16.mxu0 0
  %603 = vmatpush2.bf16.xpose.msra.mxu0 0
  %604 = vmatprep.mubr.bf16.mxu0 0
  %605 = vmatmul.mubr.bf16.gmra.mxu0 %v567
  %v606 = vpop.f32.mrf.mxu0
  %v607 = vadd.f32 0.0, %v606
  %v608 = vpop.f32.mrf.mxu0
  %v609 = vpop.f32.mrf.mxu0
  %v610 = vpop.f32.mrf.mxu0
  %611 = vdwg.mxu0
  %v612 = vsel %vm19, %v551, -inf
  %613 = vmax.xlane.f32.xlu0 %v612
  %v614 = vpop.xlane.xlu0 %613
  %v615 = vsel %vm19, %v607, -inf
  %616 = vmax.xlane.f32.xlu0 %v615
  %v617 = vpop.xlane.xlu0 %616
  %v618 = vsub.f32 %v551, %v614
  %v619 = vsub.f32 %v607, %v617
  %v620 = vmul.f32 %v618, 1.442695
  %v621 = vpow.pop %v620
  %v622 = vmul.f32 %v619, 1.442695
  %v623 = vpow.pop %v622
  %v624 = vsel %vm19, %v621, 0.0
  %625 = vadd.xlane.f32.xlu0 %v624
  %v626 = vpop.xlane.xlu0 %625
  %v627 = vsel %vm19, %v623, 0.0
  %628 = vadd.xlane.f32.xlu0 %v627
  %v629 = vpop.xlane.xlu0 %628
  %v630 = vrcp.pop %v626
  %v631 = vrcp.pop %v629
  %v632 = vmul.f32 %v621, %v630
  %v633 = vmul.f32 %v623, %v631
  %v634 = vpack.c.bf16 %v632, %v632
  %v635 = vpack.c.bf16 %v633, %v633
  %636 = vrot.lane.b32.xlu0 %v507, 48
  %v637 = vpop.permute.xlu0 %636
  %v639 = vsel %vm19, %v634, 0
  %v642 = vsel %vm146, %v637, 0
  %644 = vmatprep.subr.bf16.mxu0 0
  %645 = vmatpush1.bf16.msra.mxu0 0
  %646 = vmatprep.subr.bf16.mxu0 0
  %647 = vmatpush1.bf16.msra.mxu0 0
  %648 = vmatprep.subr.bf16.mxu0 0
  %649 = vmatpush1.bf16.msra.mxu0 0
  %650 = vmatprep.subr.bf16.mxu0 0
  %651 = vmatpush1.bf16.msra.mxu0 0
  %652 = vmatprep.subr.bf16.mxu0 0
  %653 = vmatpush1.bf16.msra.mxu0 0
  %654 = vmatprep.subr.bf16.mxu0 0
  %655 = vmatpush1.bf16.msra.mxu0 0
  %656 = vmatprep.subr.bf16.mxu0 0
  %657 = vmatpush1.bf16.msra.mxu0 0
  %658 = vmatprep.subr.bf16.mxu0 0
  %659 = vmatpush1.bf16.msra.mxu0 %v642
  %660 = vmatprep.subr.bf16.mxu0 0
  %661 = vmatpush2.bf16.msra.mxu0 0
  %662 = vmatprep.subr.bf16.mxu0 0
  %663 = vmatpush2.bf16.msra.mxu0 0
  %664 = vmatprep.subr.bf16.mxu0 0
  %665 = vmatpush2.bf16.msra.mxu0 0
  %666 = vmatprep.subr.bf16.mxu0 0
  %667 = vmatpush2.bf16.msra.mxu0 0
  %668 = vmatprep.subr.bf16.mxu0 0
  %669 = vmatpush2.bf16.msra.mxu0 0
  %670 = vmatprep.subr.bf16.mxu0 0
  %671 = vmatpush2.bf16.msra.mxu0 0
  %672 = vmatprep.subr.bf16.mxu0 0
  %673 = vmatpush2.bf16.msra.mxu0 0
  %674 = vmatprep.subr.bf16.mxu0 0
  %675 = vmatpush2.bf16.msra.mxu0 0
  %676 = vmatprep.mubr.bf16.mxu0 0
  %677 = vmatmul.mubr.bf16.gmra.mxu0 %v639
  %v678 = vpop.f32.mrf.mxu0
  %v679 = vadd.f32 0.0, %v678
  %v680 = vpop.f32.mrf.mxu0
  %v681 = vpop.f32.mrf.mxu0
  %v682 = vpop.f32.mrf.mxu0
  %683 = vdwg.mxu0
  %684 = vrot.lane.b32.xlu0 %v563, 48
  %v685 = vpop.permute.xlu0 %684
  %v687 = vsel %vm19, %v635, 0
  %v690 = vsel %vm146, %v685, 0
  %692 = vmatprep.subr.bf16.mxu0 0
  %693 = vmatpush1.bf16.msra.mxu0 0
  %694 = vmatprep.subr.bf16.mxu0 0
  %695 = vmatpush1.bf16.msra.mxu0 0
  %696 = vmatprep.subr.bf16.mxu0 0
  %697 = vmatpush1.bf16.msra.mxu0 0
  %698 = vmatprep.subr.bf16.mxu0 0
  %699 = vmatpush1.bf16.msra.mxu0 0
  %700 = vmatprep.subr.bf16.mxu0 0
  %701 = vmatpush1.bf16.msra.mxu0 0
  %702 = vmatprep.subr.bf16.mxu0 0
  %703 = vmatpush1.bf16.msra.mxu0 0
  %704 = vmatprep.subr.bf16.mxu0 0
  %705 = vmatpush1.bf16.msra.mxu0 0
  %706 = vmatprep.subr.bf16.mxu0 0
  %707 = vmatpush1.bf16.msra.mxu0 %v690
  %708 = vmatprep.subr.bf16.mxu0 0
  %709 = vmatpush2.bf16.msra.mxu0 0
  %710 = vmatprep.subr.bf16.mxu0 0
  %711 = vmatpush2.bf16.msra.mxu0 0
  %712 = vmatprep.subr.bf16.mxu0 0
  %713 = vmatpush2.bf16.msra.mxu0 0
  %714 = vmatprep.subr.bf16.mxu0 0
  %715 = vmatpush2.bf16.msra.mxu0 0
  %716 = vmatprep.subr.bf16.mxu0 0
  %717 = vmatpush2.bf16.msra.mxu0 0
  %718 = vmatprep.subr.bf16.mxu0 0
  %719 = vmatpush2.bf16.msra.mxu0 0
  %720 = vmatprep.subr.bf16.mxu0 0
  %721 = vmatpush2.bf16.msra.mxu0 0
  %722 = vmatprep.subr.bf16.mxu0 0
  %723 = vmatpush2.bf16.msra.mxu0 0
  %724 = vmatprep.mubr.bf16.mxu0 0
  %725 = vmatmul.mubr.bf16.gmra.mxu0 %v687
  %v726 = vpop.f32.mrf.mxu0
  %v727 = vadd.f32 0.0, %v726
  %v728 = vpop.f32.mrf.mxu0
  %v729 = vpop.f32.mrf.mxu0
  %v730 = vpop.f32.mrf.mxu0
  %731 = vdwg.mxu0
  %v732 = vpack.c.bf16 %v679, %v679
  %v733 = vpack.c.bf16 %v727, %v727
  %v736 = vunpack.c.l.b16 %v732
  %v737 = vunpack.c.l.b16 %v733
  %v738 = vpack.c.b16 %v736, %v736
  %v739 = vpack.c.b16 %v737, %v737
  %740 = vrot.lane.b32.xlu0 %v738, 16
  %v741 = vpop.permute.xlu0 %740
  %742 = vrot.lane.b32.xlu0 %v739, 16
  %v743 = vpop.permute.xlu0 %742
  %vm746 = vcmask 191616
  %747 = vst.msk [vmem:[%s1] sm:$0xf] %vm746, %v741
  %748 = vst.msk [vmem:[%s1 + $0x4] sm:$0xf] %vm746, %v743
  %v749 = vld [vmem:[%s0] sm:$0xf]
  %v750 = vld [vmem:[%s0 + $0x4] sm:$0xf]
  %v751 = vmul.bf16 %v749, 1052065461
  %v752 = vmul.bf16 %v750, 1052065461
  %v754 = vunpack.c.l.b16 %v751
  %v755 = vpack.c.b16 %v754, %v754
  %756 = vrot.lane.b32.xlu0 %v755, 104
  %v757 = vpop.permute.xlu0 %756
  %v759 = vunpack.c.l.b16 %v749
  %v760 = vpack.c.b16 %v759, %v759
  %761 = vrot.lane.b32.xlu0 %v760, 72
  %v762 = vpop.permute.xlu0 %761
  %v764 = vsel %vm19, %v757, 0
  %v767 = vsel %vm19, %v762, 0
  %769 = vmatprep.subr.bf16.mxu0 0
  %770 = vmatpush1.bf16.xpose.msra.mxu0 0
  %771 = vmatprep.subr.bf16.mxu0 0
  %772 = vmatpush1.bf16.xpose.msra.mxu0 0
  %773 = vmatprep.subr.bf16.mxu0 0
  %774 = vmatpush1.bf16.xpose.msra.mxu0 0
  %775 = vmatprep.subr.bf16.mxu0 0
  %776 = vmatpush1.bf16.xpose.msra.mxu0 0
  %777 = vmatprep.subr.bf16.mxu0 0
  %778 = vmatpush1.bf16.xpose.msra.mxu0 0
  %779 = vmatprep.subr.bf16.mxu0 0
  %780 = vmatpush1.bf16.xpose.msra.mxu0 0
  %781 = vmatprep.subr.bf16.mxu0 0
  %782 = vmatpush1.bf16.xpose.msra.mxu0 0
  %783 = vmatprep.subr.bf16.mxu0 0
  %784 = vmatpush1.bf16.xpose.msra.mxu0 %v767
  %785 = vmatprep.subr.bf16.mxu0 0
  %786 = vmatpush2.bf16.xpose.msra.mxu0 0
  %787 = vmatprep.subr.bf16.mxu0 0
  %788 = vmatpush2.bf16.xpose.msra.mxu0 0
  %789 = vmatprep.subr.bf16.mxu0 0
  %790 = vmatpush2.bf16.xpose.msra.mxu0 0
  %791 = vmatprep.subr.bf16.mxu0 0
  %792 = vmatpush2.bf16.xpose.msra.mxu0 0
  %793 = vmatprep.subr.bf16.mxu0 0
  %794 = vmatpush2.bf16.xpose.msra.mxu0 0
  %795 = vmatprep.subr.bf16.mxu0 0
  %796 = vmatpush2.bf16.xpose.msra.mxu0 0
  %797 = vmatprep.subr.bf16.mxu0 0
  %798 = vmatpush2.bf16.xpose.msra.mxu0 0
  %799 = vmatprep.subr.bf16.mxu0 0
  %800 = vmatpush2.bf16.xpose.msra.mxu0 0
  %801 = vmatprep.mubr.bf16.mxu0 0
  %802 = vmatmul.mubr.bf16.gmra.mxu0 %v764
  %v803 = vpop.f32.mrf.mxu0
  %v804 = vadd.f32 0.0, %v803
  %v805 = vpop.f32.mrf.mxu0
  %v806 = vpop.f32.mrf.mxu0
  %v807 = vpop.f32.mrf.mxu0
  %808 = vdwg.mxu0
  %v810 = vunpack.c.l.b16 %v752
  %v811 = vpack.c.b16 %v810, %v810
  %812 = vrot.lane.b32.xlu0 %v811, 104
  %v813 = vpop.permute.xlu0 %812
  %v815 = vunpack.c.l.b16 %v750
  %v816 = vpack.c.b16 %v815, %v815
  %817 = vrot.lane.b32.xlu0 %v816, 72
  %v818 = vpop.permute.xlu0 %817
  %v820 = vsel %vm19, %v813, 0
  %v823 = vsel %vm19, %v818, 0
  %825 = vmatprep.subr.bf16.mxu0 0
  %826 = vmatpush1.bf16.xpose.msra.mxu0 0
  %827 = vmatprep.subr.bf16.mxu0 0
  %828 = vmatpush1.bf16.xpose.msra.mxu0 0
  %829 = vmatprep.subr.bf16.mxu0 0
  %830 = vmatpush1.bf16.xpose.msra.mxu0 0
  %831 = vmatprep.subr.bf16.mxu0 0
  %832 = vmatpush1.bf16.xpose.msra.mxu0 0
  %833 = vmatprep.subr.bf16.mxu0 0
  %834 = vmatpush1.bf16.xpose.msra.mxu0 0
  %835 = vmatprep.subr.bf16.mxu0 0
  %836 = vmatpush1.bf16.xpose.msra.mxu0 0
  %837 = vmatprep.subr.bf16.mxu0 0
  %838 = vmatpush1.bf16.xpose.msra.mxu0 0
  %839 = vmatprep.subr.bf16.mxu0 0
  %840 = vmatpush1.bf16.xpose.msra.mxu0 %v823
  %841 = vmatprep.subr.bf16.mxu0 0
  %842 = vmatpush2.bf16.xpose.msra.mxu0 0
  %843 = vmatprep.subr.bf16.mxu0 0
  %844 = vmatpush2.bf16.xpose.msra.mxu0 0
  %845 = vmatprep.subr.bf16.mxu0 0
  %846 = vmatpush2.bf16.xpose.msra.mxu0 0
  %847 = vmatprep.subr.bf16.mxu0 0
  %848 = vmatpush2.bf16.xpose.msra.mxu0 0
  %849 = vmatprep.subr.bf16.mxu0 0
  %850 = vmatpush2.bf16.xpose.msra.mxu0 0
  %851 = vmatprep.subr.bf16.mxu0 0
  %852 = vmatpush2.bf16.xpose.msra.mxu0 0
  %853 = vmatprep.subr.bf16.mxu0 0
  %854 = vmatpush2.bf16.xpose.msra.mxu0 0
  %855 = vmatprep.subr.bf16.mxu0 0
  %856 = vmatpush2.bf16.xpose.msra.mxu0 0
  %857 = vmatprep.mubr.bf16.mxu0 0
  %858 = vmatmul.mubr.bf16.gmra.mxu0 %v820
  %v859 = vpop.f32.mrf.mxu0
  %v860 = vadd.f32 0.0, %v859
  %v861 = vpop.f32.mrf.mxu0
  %v862 = vpop.f32.mrf.mxu0
  %v863 = vpop.f32.mrf.mxu0
  %864 = vdwg.mxu0
  %v865 = vsel %vm19, %v804, -inf
  %866 = vmax.xlane.f32.xlu0 %v865
  %v867 = vpop.xlane.xlu0 %866
  %v868 = vsel %vm19, %v860, -inf
  %869 = vmax.xlane.f32.xlu0 %v868
  %v870 = vpop.xlane.xlu0 %869
  %v871 = vsub.f32 %v804, %v867
  %v872 = vsub.f32 %v860, %v870
  %v873 = vmul.f32 %v871, 1.442695
  %v874 = vpow.pop %v873
  %v875 = vmul.f32 %v872, 1.442695
  %v876 = vpow.pop %v875
  %v877 = vsel %vm19, %v874, 0.0
  %878 = vadd.xlane.f32.xlu0 %v877
  %v879 = vpop.xlane.xlu0 %878
  %v880 = vsel %vm19, %v876, 0.0
  %881 = vadd.xlane.f32.xlu0 %v880
  %v882 = vpop.xlane.xlu0 %881
  %v883 = vrcp.pop %v879
  %v884 = vrcp.pop %v882
  %v885 = vmul.f32 %v874, %v883
  %v886 = vmul.f32 %v876, %v884
  %v887 = vpack.c.bf16 %v885, %v885
  %v888 = vpack.c.bf16 %v886, %v886
  %889 = vrot.lane.b32.xlu0 %v760, 40
  %v890 = vpop.permute.xlu0 %889
  %v892 = vsel %vm19, %v887, 0
  %v895 = vsel %vm146, %v890, 0
  %897 = vmatprep.subr.bf16.mxu0 0
  %898 = vmatpush1.bf16.msra.mxu0 0
  %899 = vmatprep.subr.bf16.mxu0 0
  %900 = vmatpush1.bf16.msra.mxu0 0
  %901 = vmatprep.subr.bf16.mxu0 0
  %902 = vmatpush1.bf16.msra.mxu0 0
  %903 = vmatprep.subr.bf16.mxu0 0
  %904 = vmatpush1.bf16.msra.mxu0 0
  %905 = vmatprep.subr.bf16.mxu0 0
  %906 = vmatpush1.bf16.msra.mxu0 0
  %907 = vmatprep.subr.bf16.mxu0 0
  %908 = vmatpush1.bf16.msra.mxu0 0
  %909 = vmatprep.subr.bf16.mxu0 0
  %910 = vmatpush1.bf16.msra.mxu0 0
  %911 = vmatprep.subr.bf16.mxu0 0
  %912 = vmatpush1.bf16.msra.mxu0 %v895
  %913 = vmatprep.subr.bf16.mxu0 0
  %914 = vmatpush2.bf16.msra.mxu0 0
  %915 = vmatprep.subr.bf16.mxu0 0
  %916 = vmatpush2.bf16.msra.mxu0 0
  %917 = vmatprep.subr.bf16.mxu0 0
  %918 = vmatpush2.bf16.msra.mxu0 0
  %919 = vmatprep.subr.bf16.mxu0 0
  %920 = vmatpush2.bf16.msra.mxu0 0
  %921 = vmatprep.subr.bf16.mxu0 0
  %922 = vmatpush2.bf16.msra.mxu0 0
  %923 = vmatprep.subr.bf16.mxu0 0
  %924 = vmatpush2.bf16.msra.mxu0 0
  %925 = vmatprep.subr.bf16.mxu0 0
  %926 = vmatpush2.bf16.msra.mxu0 0
  %927 = vmatprep.subr.bf16.mxu0 0
  %928 = vmatpush2.bf16.msra.mxu0 0
  %929 = vmatprep.mubr.bf16.mxu0 0
  %930 = vmatmul.mubr.bf16.gmra.mxu0 %v892
  %v931 = vpop.f32.mrf.mxu0
  %v932 = vadd.f32 0.0, %v931
  %v933 = vpop.f32.mrf.mxu0
  %v934 = vpop.f32.mrf.mxu0
  %v935 = vpop.f32.mrf.mxu0
  %936 = vdwg.mxu0
  %937 = vrot.lane.b32.xlu0 %v816, 40
  %v938 = vpop.permute.xlu0 %937
  %v940 = vsel %vm19, %v888, 0
  %v943 = vsel %vm146, %v938, 0
  %945 = vmatprep.subr.bf16.mxu0 0
  %946 = vmatpush1.bf16.msra.mxu0 0
  %947 = vmatprep.subr.bf16.mxu0 0
  %948 = vmatpush1.bf16.msra.mxu0 0
  %949 = vmatprep.subr.bf16.mxu0 0
  %950 = vmatpush1.bf16.msra.mxu0 0
  %951 = vmatprep.subr.bf16.mxu0 0
  %952 = vmatpush1.bf16.msra.mxu0 0
  %953 = vmatprep.subr.bf16.mxu0 0
  %954 = vmatpush1.bf16.msra.mxu0 0
  %955 = vmatprep.subr.bf16.mxu0 0
  %956 = vmatpush1.bf16.msra.mxu0 0
  %957 = vmatprep.subr.bf16.mxu0 0
  %958 = vmatpush1.bf16.msra.mxu0 0
  %959 = vmatprep.subr.bf16.mxu0 0
  %960 = vmatpush1.bf16.msra.mxu0 %v943
  %961 = vmatprep.subr.bf16.mxu0 0
  %962 = vmatpush2.bf16.msra.mxu0 0
  %963 = vmatprep.subr.bf16.mxu0 0
  %964 = vmatpush2.bf16.msra.mxu0 0
  %965 = vmatprep.subr.bf16.mxu0 0
  %966 = vmatpush2.bf16.msra.mxu0 0
  %967 = vmatprep.subr.bf16.mxu0 0
  %968 = vmatpush2.bf16.msra.mxu0 0
  %969 = vmatprep.subr.bf16.mxu0 0
  %970 = vmatpush2.bf16.msra.mxu0 0
  %971 = vmatprep.subr.bf16.mxu0 0
  %972 = vmatpush2.bf16.msra.mxu0 0
  %973 = vmatprep.subr.bf16.mxu0 0
  %974 = vmatpush2.bf16.msra.mxu0 0
  %975 = vmatprep.subr.bf16.mxu0 0
  %976 = vmatpush2.bf16.msra.mxu0 0
  %977 = vmatprep.mubr.bf16.mxu0 0
  %978 = vmatmul.mubr.bf16.gmra.mxu0 %v940
  %v979 = vpop.f32.mrf.mxu0
  %v980 = vadd.f32 0.0, %v979
  %v981 = vpop.f32.mrf.mxu0
  %v982 = vpop.f32.mrf.mxu0
  %v983 = vpop.f32.mrf.mxu0
  %984 = vdwg.mxu0
  %v985 = vpack.c.bf16 %v932, %v932
  %v986 = vpack.c.bf16 %v980, %v980
  %v989 = vunpack.c.l.b16 %v985
  %v990 = vunpack.c.l.b16 %v986
  %v991 = vpack.c.b16 %v989, %v989
  %v992 = vpack.c.b16 %v990, %v990
  %993 = vrot.lane.b32.xlu0 %v991, 24
  %v994 = vpop.permute.xlu0 %993
  %995 = vrot.lane.b32.xlu0 %v992, 24
  %v996 = vpop.permute.xlu0 %995
  %vm999 = vcmask 257216
  %1000 = vst.msk [vmem:[%s1] sm:$0xf] %vm999, %v994
  %1001 = vst.msk [vmem:[%s1 + $0x4] sm:$0xf] %vm999, %v996
  // Predicated region
  $region6: #{gaussian_transformer_llm.11} parent=0 // pred_check
    _
  $region7: #{gaussian_transformer_llm.11} parent=0 // pred_check_branch
    %1003 = sbr.rel (0) target = $region9
  $region8: #{gaussian_transformer_llm.11} parent=0 // pred_region
    _
  $region9: #{gaussian_transformer_llm.11} parent=0 // pred_fallthru
    _
  // Predicated region
  $region10: #{gaussian_transformer_llm.11} parent=0 // pred_check
    _
  $region11: #{gaussian_transformer_llm.11} parent=0 // pred_check_branch
    %1005 = sbr.rel (0) target = $region13
  $region12: #{gaussian_transformer_llm.11} parent=0 // pred_region
    _
  $region13: #{gaussian_transformer_llm.11} parent=0 // pred_fallthru
    _

// kernel: gaussian_transformer_llm.19
$region0: #{gaussian_transformer_llm.19}
  #allocation0 [shape = 'u32[]', space=smem, size = 0x4, offset = 0x4, fixed_abs, tag = 'smem constant byte address 0x4 - core index']
  #allocation1 [shape = 'u32[144,128]{1,0:T(1,128)}', space=vmem, size = 0x12000, scoped, tag = 'internal scratch']
  #allocation2 [shape = 'f32[16,128]{1,0:T(8,128)}', space=vmem, size = 0x2000, scoped, tag = 'scratch operand']
  %s0 = inlined_call_operand.vmem [shape: bf16[16,32], index: 0, kind: input, shape index: {}]
  %s1 = inlined_call_operand.vmem [shape: bf16[32,128], index: 1, kind: input, shape index: {}]
  %s2 = inlined_call_operand.vmem [shape: f32[1,128], index: 2, kind: input, shape index: {}]
  %s3 = inlined_call_operand.hbm [shape: f32[16,128], index: 3, kind: output, shape index: {}]
  %s4 = sld [smem:[#allocation0]]
  $region30: #{gaussian_transformer_llm.19} parent=0
    _
  %s6 = ssub.s32 1, %s4
  %s7 = scalar_select 0, %s6, %s4
  $region1: #{gaussian_transformer_llm.19} parent=0
    #allocation3 [shape = 'u8[8192]{0}', space=vmem, size = 0x2000, scoped, tag = 'output window, operand 0, single buffered']
    #allocation4 [shape = 's32[1]{0}', space=sflag, size = 0x4, scoped, tag = 'scoped memory for gaussian_transformer_llm.19']
    %8 = vsyncpa [#allocation4], 0
    // Predicated region
    $region2: #{gaussian_transformer_llm.19} parent=1 // pred_check
      _
    $region3: #{gaussian_transformer_llm.19} parent=1 // pred_check_branch
      %10 = sbr.rel (0) target = $region5
    $region4: #{gaussian_transformer_llm.19} parent=1 // pred_region
      _
    $region5: #{gaussian_transformer_llm.19} parent=1 // pred_fallthru
      _
    // Predicated region
    $region6: #{gaussian_transformer_llm.19} parent=1 // pred_check
      _
    $region7: #{gaussian_transformer_llm.19} parent=1 // pred_check_branch
      %12 = sbr.rel (0) target = $region9
    $region8: #{gaussian_transformer_llm.19} parent=1 // pred_region
      _
    $region9: #{gaussian_transformer_llm.19} parent=1 // pred_fallthru
      _
    // Predicated region
    $region10: #{gaussian_transformer_llm.19} parent=1 // pred_check
      _
    $region11: #{gaussian_transformer_llm.19} parent=1 // pred_check_branch
      %14 = sbr.rel (0) target = $region13
    $region12: #{gaussian_transformer_llm.19} parent=1 // pred_region
      _
    $region13: #{gaussian_transformer_llm.19} parent=1 // pred_fallthru
      _
    %p16 = scmp.eq.s32.totalorder 0, 0
    // Predicated region
    $region14: #{gaussian_transformer_llm.19} parent=1 // pred_check
      %p17 = pneg %p16
    $region15: #{gaussian_transformer_llm.19} parent=1 // pred_check_branch
      %19 = sbr.rel (%p17) target = $region17
    $region16: #{gaussian_transformer_llm.19} parent=1 // pred_region
      %20 = vst [vmem:[#allocation2] sm:$0xff] 0.0
      %21 = vst [vmem:[#allocation2 + $0x8] sm:$0xff] 0.0
    $region17: #{gaussian_transformer_llm.19} parent=1 // pred_fallthru
      _
    %v22 = vld [vmem:[#allocation2] sm:$0xff]
    %v23 = vld [vmem:[#allocation2 + $0x8] sm:$0xff]
    %v24 = vld [vmem:[%s0] sm:$0xf]
    %v25 = vld [vmem:[%s0 + $0x4] sm:$0xf]
    %v26 = vld [vmem:[%s1] sm:$0xf]
    %v27 = vld [vmem:[%s1 + $0x4] sm:$0xf]
    %v28 = vld [vmem:[%s1 + $0x8] sm:$0xf]
    %v29 = vld [vmem:[%s1 + $0xc] sm:$0xf]
    %v32 = vunpack.c.l.b16 %v24
    %v33 = vunpack.c.l.b16 %v25
    %v34 = vpack.c.b16 %v33, %v32
    %v39 = vunpack.c.l.b16 %v26
    %v40 = vunpack.c.l.b16 %v27
    %v41 = vunpack.c.l.b16 %v28
    %v42 = vunpack.c.l.b16 %v29
    %v43 = vpack.c.b16 %v40, %v39
    %v44 = vpack.c.b16 %v42, %v41
    %vm47 = vcmask 261120
    %v49 = vsel %vm47, %v34, 0
    %51 = vmatprep.subr.bf16.mxu0 0
    %52 = vmatpush1.bf16.msra.mxu0 0
    %53 = vmatprep.subr.bf16.mxu0 0
    %54 = vmatpush1.bf16.msra.mxu0 0
    %55 = vmatprep.subr.bf16.mxu0 0
    %56 = vmatpush1.bf16.msra.mxu0 0
    %57 = vmatprep.subr.bf16.mxu0 0
    %58 = vmatpush1.bf16.msra.mxu0 0
    %59 = vmatprep.subr.bf16.mxu0 0
    %60 = vmatpush1.bf16.msra.mxu0 0
    %61 = vmatprep.subr.bf16.mxu0 0
    %62 = vmatpush1.bf16.msra.mxu0 0
    %63 = vmatprep.subr.bf16.mxu0 0
    %64 = vmatpush1.bf16.msra.mxu0 %v44
    %65 = vmatprep.subr.bf16.mxu0 0
    %66 = vmatpush1.bf16.msra.mxu0 %v43
    %67 = vmatprep.subr.bf16.mxu0 0
    %68 = vmatpush2.bf16.msra.mxu0 0
    %69 = vmatprep.subr.bf16.mxu0 0
    %70 = vmatpush2.bf16.msra.mxu0 0
    %71 = vmatprep.subr.bf16.mxu0 0
    %72 = vmatpush2.bf16.msra.mxu0 0
    %73 = vmatprep.subr.bf16.mxu0 0
    %74 = vmatpush2.bf16.msra.mxu0 0
    %75 = vmatprep.subr.bf16.mxu0 0
    %76 = vmatpush2.bf16.msra.mxu0 0
    %77 = vmatprep.subr.bf16.mxu0 0
    %78 = vmatpush2.bf16.msra.mxu0 0
    %79 = vmatprep.subr.bf16.mxu0 0
    %80 = vmatpush2.bf16.msra.mxu0 0
    %81 = vmatprep.subr.bf16.mxu0 0
    %82 = vmatpush2.bf16.msra.mxu0 0
    %83 = vmatprep.mubr.bf16.mxu0 0
    %84 = vmatmul.mubr.bf16.gmra.mxu0 %v49
    %v85 = vpop.f32.mrf.mxu0
    %v86 = vadd.f32 0.0, %v85
    %v87 = vpop.f32.mrf.mxu0
    %v88 = vpop.f32.mrf.mxu0
    %v89 = vadd.f32 0.0, %v88
    %v90 = vpop.f32.mrf.mxu0
    %91 = vdwg.mxu0
    %v92 = vadd.f32 %v22, %v86
    %v93 = vadd.f32 %v23, %v89
    %94 = vst [vmem:[#allocation2] sm:$0xff] %v92
    %95 = vst [vmem:[#allocation2 + $0x8] sm:$0xff] %v93
    // Predicated region
    $region18: #{gaussian_transformer_llm.19} parent=1 // pred_check
      %p96 = pneg %p16
    $region19: #{gaussian_transformer_llm.19} parent=1 // pred_check_branch
      %98 = sbr.rel (%p96) target = $region21
    $region20: #{gaussian_transformer_llm.19} parent=1 // pred_region
      %v99 = vld [vmem:[#allocation2] sm:$0xff]
      %v100 = vld [vmem:[#allocation2 + $0x8] sm:$0xff]
      %v101 = vld [vmem:[%s2] sm:$0x1]
      %v103 = vlaneseq
      %v104 = vshrl.u32 %v103, 7
      %v105 = vsub.s32 0, %v104
      %v106 = vrot.slane %v101, %v105
      %v108 = vadd.f32 %v99, %v106
      %v109 = vadd.f32 %v100, %v106
      %110 = vst [vmem:[#allocation3] sm:$0xff] %v108
      %111 = vst [vmem:[#allocation3 + $0x8] sm:$0xff] %v109
    $region21: #{gaussian_transformer_llm.19} parent=1 // pred_fallthru
      _
    // Predicated region
    $region22: #{gaussian_transformer_llm.19} parent=1 // pred_check
      _
    $region23: #{gaussian_transformer_llm.19} parent=1 // pred_check_branch
      %113 = sbr.rel (0) target = $region25
    $region24: #{gaussian_transformer_llm.19} parent=1 // pred_region
      %s115 = ssub.s32 256, 256
      %116 = vsyncadd [#allocation4], %s115
      %s117 = sshll.u32 [#allocation3], 4
      %s118 = int_to_ptr.vmem [resolvable:$true] %s117
      %123 = dma.vmem_to_hbm [thread:$0]  %s118, 256, %s3, [#allocation4], 128, 128, 8
    $region25: #{gaussian_transformer_llm.19} parent=1 // pred_fallthru
      _
    // Predicated region
    $region26: #{gaussian_transformer_llm.19} parent=1 // pred_check
      _
    $region27: #{gaussian_transformer_llm.19} parent=1 // pred_check_branch
      %125 = sbr.rel (0) target = $region29
    $region28: #{gaussian_transformer_llm.19} parent=1 // pred_region
      %126 = dma.done [#allocation4], 256
    $region29: #{gaussian_transformer_llm.19} parent=1 // pred_fallthru
      _
    %127 = vsyncpa [#allocation4], 1

// kernel: gaussian_transformer_llm.18
$region0: #{gaussian_transformer_llm.18}
  #allocation0 [shape = 'u32[]', space=smem, size = 0x4, offset = 0x4, fixed_abs, tag = 'smem constant byte address 0x4 - core index']
  #allocation1 [shape = 'u32[144,128]{1,0:T(1,128)}', space=vmem, size = 0x12000, scoped, tag = 'internal scratch']
  %s0 = inlined_call_operand.vmem [shape: bf16[16,32], index: 0, kind: input, shape index: {}]
  %s1 = inlined_call_operand.vmem [shape: bf16[32,64], index: 1, kind: input, shape index: {}]
  %s2 = inlined_call_operand.vmem [shape: f32[1,64], index: 2, kind: input, shape index: {}]
  %s3 = inlined_call_operand.vmem [shape: bf16[16,32], index: 3, kind: input, shape index: {}]
  %s4 = inlined_call_operand.vmem [shape: bf16[16,32], index: 4, kind: output, shape index: {0}]
  %s5 = inlined_call_operand.vmem [shape: f32[16,1], index: 5, kind: output, shape index: {1}]
  %6 = xla_tuple %s4, %s5
  %s7 = sld [smem:[#allocation0]]
  $region34: #{gaussian_transformer_llm.18} parent=0
    _
  %s9 = ssub.s32 1, %s7
  %s10 = scalar_select 0, %s9, %s7
  // Predicated region
  $region2: #{gaussian_transformer_llm.18} parent=0 // pred_check
    _
  $region3: #{gaussian_transformer_llm.18} parent=0 // pred_check_branch
    %12 = sbr.rel (0) target = $region5
  $region4: #{gaussian_transformer_llm.18} parent=0 // pred_region
    _
  $region5: #{gaussian_transformer_llm.18} parent=0 // pred_fallthru
    _
  // Predicated region
  $region6: #{gaussian_transformer_llm.18} parent=0 // pred_check
    _
  $region7: #{gaussian_transformer_llm.18} parent=0 // pred_check_branch
    %14 = sbr.rel (0) target = $region9
  $region8: #{gaussian_transformer_llm.18} parent=0 // pred_region
    _
  $region9: #{gaussian_transformer_llm.18} parent=0 // pred_fallthru
    _
  // Predicated region
  $region10: #{gaussian_transformer_llm.18} parent=0 // pred_check
    _
  $region11: #{gaussian_transformer_llm.18} parent=0 // pred_check_branch
    %16 = sbr.rel (0) target = $region13
  $region12: #{gaussian_transformer_llm.18} parent=0 // pred_region
    _
  $region13: #{gaussian_transformer_llm.18} parent=0 // pred_fallthru
    _
  // Predicated region
  $region14: #{gaussian_transformer_llm.18} parent=0 // pred_check
    _
  $region15: #{gaussian_transformer_llm.18} parent=0 // pred_check_branch
    %18 = sbr.rel (0) target = $region17
  $region16: #{gaussian_transformer_llm.18} parent=0 // pred_region
    _
  $region17: #{gaussian_transformer_llm.18} parent=0 // pred_fallthru
    _
  %v20 = vld [vmem:[%s0] sm:$0xf]
  %v21 = vld [vmem:[%s0 + $0x4] sm:$0xf]
  %v22 = vld [vmem:[%s1] sm:$0xf]
  %v23 = vld [vmem:[%s1 + $0x4] sm:$0xf]
  %v24 = vld [vmem:[%s1 + $0x8] sm:$0xf]
  %v25 = vld [vmem:[%s1 + $0xc] sm:$0xf]
  %v26 = vld [vmem:[%s2] sm:$0x1]
  %v28 = vlaneseq
  %v29 = vshrl.u32 %v28, 7
  %v30 = vsub.s32 0, %v29
  %v31 = vrot.slane %v26, %v30
  %v35 = vunpack.c.l.b16 %v20
  %v36 = vunpack.c.l.b16 %v21
  %v37 = vpack.c.b16 %v36, %v35
  %v42 = vunpack.c.l.b16 %v22
  %v43 = vunpack.c.l.b16 %v23
  %v44 = vunpack.c.l.b16 %v24
  %v45 = vunpack.c.l.b16 %v25
  %v46 = vpack.c.b16 %v43, %v42
  %v47 = vpack.c.b16 %v45, %v44
  %vm50 = vcmask 261120
  %v52 = vsel %vm50, %v37, 0
  %54 = vmatprep.subr.bf16.mxu0 0
  %55 = vmatpush1.bf16.msra.mxu0 0
  %56 = vmatprep.subr.bf16.mxu0 0
  %57 = vmatpush1.bf16.msra.mxu0 0
  %58 = vmatprep.subr.bf16.mxu0 0
  %59 = vmatpush1.bf16.msra.mxu0 0
  %60 = vmatprep.subr.bf16.mxu0 0
  %61 = vmatpush1.bf16.msra.mxu0 0
  %62 = vmatprep.subr.bf16.mxu0 0
  %63 = vmatpush1.bf16.msra.mxu0 0
  %64 = vmatprep.subr.bf16.mxu0 0
  %65 = vmatpush1.bf16.msra.mxu0 0
  %66 = vmatprep.subr.bf16.mxu0 0
  %67 = vmatpush1.bf16.msra.mxu0 %v47
  %68 = vmatprep.subr.bf16.mxu0 0
  %69 = vmatpush1.bf16.msra.mxu0 %v46
  %70 = vmatprep.subr.bf16.mxu0 0
  %71 = vmatpush2.bf16.msra.mxu0 0
  %72 = vmatprep.subr.bf16.mxu0 0
  %73 = vmatpush2.bf16.msra.mxu0 0
  %74 = vmatprep.subr.bf16.mxu0 0
  %75 = vmatpush2.bf16.msra.mxu0 0
  %76 = vmatprep.subr.bf16.mxu0 0
  %77 = vmatpush2.bf16.msra.mxu0 0
  %78 = vmatprep.subr.bf16.mxu0 0
  %79 = vmatpush2.bf16.msra.mxu0 0
  %80 = vmatprep.subr.bf16.mxu0 0
  %81 = vmatpush2.bf16.msra.mxu0 0
  %82 = vmatprep.subr.bf16.mxu0 0
  %83 = vmatpush2.bf16.msra.mxu0 0
  %84 = vmatprep.subr.bf16.mxu0 0
  %85 = vmatpush2.bf16.msra.mxu0 0
  %86 = vmatprep.mubr.bf16.mxu0 0
  %87 = vmatmul.mubr.bf16.gmra.mxu0 %v52
  %v88 = vpop.f32.mrf.mxu0
  %v89 = vadd.f32 %v31, %v88
  %v90 = vpop.f32.mrf.mxu0
  %v91 = vpop.f32.mrf.mxu0
  %v92 = vadd.f32 %v31, %v91
  %v93 = vpop.f32.mrf.mxu0
  %94 = vdwg.mxu0
  %v95 = vmul.f32 %v89, 0.5
  %v96 = vmul.f32 %v92, 0.5
  %v97 = vmul.f32 %v95, 1.442695
  %v98 = vpow.pop %v97
  %v99 = vmul.f32 %v96, 1.442695
  %v100 = vpow.pop %v99
  %v101 = vld [vmem:[%s3] sm:$0xf]
  %v102 = vld [vmem:[%s3 + $0x4] sm:$0xf]
  %v103 = vunpack.c.l.bf16 %v101
  %v104 = vunpack.c.l.bf16 %v102
  %107 = vrot.lane.b32.xlu0 %v98, 96
  %v108 = vpop.permute.xlu0 %107
  %109 = vrot.lane.b32.xlu0 %v100, 96
  %v110 = vpop.permute.xlu0 %109
  %v113 = vmul.f32 %v103, %v108
  %v114 = vmul.f32 %v104, %v110
  %v115 = vadd.f32 %v89, %v113
  %v116 = vadd.f32 %v92, %v114
  %119 = vrot.lane.b32.xlu0 %v89, 96
  %v120 = vpop.permute.xlu0 %119
  %121 = vrot.lane.b32.xlu0 %v92, 96
  %v122 = vpop.permute.xlu0 %121
  %v125 = vsel %vm50, %v120, 0.0
  %126 = vadd.xlane.f32.xlu0 %v125
  %v127 = vpop.xlane.xlu0 %126
  %v128 = vsel %vm50, %v122, 0.0
  %129 = vadd.xlane.f32.xlu0 %v128
  %v130 = vpop.xlane.xlu0 %129
  %v131 = vrcp.pop 32.0
  %v132 = vmul.f32 %v127, %v131
  %v133 = vmul.f32 %v130, %v131
  %v134 = vsub.f32 1.0, %v132
  %v135 = vsub.f32 1.0, %v133
  %v136 = vunpack.c.l.bf16 %v20
  %v137 = vunpack.c.l.bf16 %v21
  %v138 = vsub.f32 %v115, %v136
  %v139 = vsub.f32 %v116, %v137
  %v140 = vmul.f32 %v134, %v138
  %v141 = vmul.f32 %v135, %v139
  %v142 = vadd.f32 %v136, %v140
  %v143 = vadd.f32 %v137, %v141
  %v144 = vpack.c.bf16 %v143, %v142
  %v146 = vunpack.c.l.b16 %v144
  %v147 = vunpack.c.h.b16 %v144
  %v148 = vpack.c.b16 %v146, %v146
  %v149 = vpack.c.b16 %v147, %v147
  %vm152 = vcmask 257024
  %153 = vst.msk [vmem:[%s4] sm:$0xf] %vm152, %v148
  %154 = vst.msk [vmem:[%s4 + $0x4] sm:$0xf] %vm152, %v149
  %vm155 = vcmask 7168
  %156 = vst.msk [vmem:[%s5] sm:$0xff] %vm155, %v132
  %157 = vst.msk [vmem:[%s5 + $0x8] sm:$0xff] %vm155, %v133
  // Predicated region
  $region18: #{gaussian_transformer_llm.18} parent=0 // pred_check
    _
  $region19: #{gaussian_transformer_llm.18} parent=0 // pred_check_branch
    %159 = sbr.rel (0) target = $region21
  $region20: #{gaussian_transformer_llm.18} parent=0 // pred_region
    _
  $region21: #{gaussian_transformer_llm.18} parent=0 // pred_fallthru
    _
  // Predicated region
  $region22: #{gaussian_transformer_llm.18} parent=0 // pred_check
    _
  $region23: #{gaussian_transformer_llm.18} parent=0 // pred_check_branch
    %161 = sbr.rel (0) target = $region25
  $region24: #{gaussian_transformer_llm.18} parent=0 // pred_region
    _
  $region25: #{gaussian_transformer_llm.18} parent=0 // pred_fallthru
    _
  // Predicated region
  $region26: #{gaussian_transformer_llm.18} parent=0 // pred_check
    _
  $region27: #{gaussian_transformer_llm.18} parent=0 // pred_check_branch
    %163 = sbr.rel (0) target = $region29
  $region28: #{gaussian_transformer_llm.18} parent=0 // pred_region
    _
  $region29: #{gaussian_transformer_llm.18} parent=0 // pred_fallthru
    _
  // Predicated region
  $region30: #{gaussian_transformer_llm.18} parent=0 // pred_check
    _
  $region31: #{gaussian_transformer_llm.18} parent=0 // pred_check_branch
    %165 = sbr.rel (0) target = $region33
  $region32: #{gaussian_transformer_llm.18} parent=0 // pred_region
    _
  $region33: #{gaussian_transformer_llm.18} parent=0 // pred_fallthru
    _

</llo_original>
